<compile_context>
chip_gen: v5e
topology: v5e:2x2
jax: 0.10.0
libtpu: 0.0.40
codegen_flags: <defaults>
</compile_context>

<pallas_src>
import functools

import jax
import jax.numpy as jnp
from jax import lax
from jax.experimental import pallas as pl
from jax.experimental.pallas import tpu as pltpu


def _basic_block_kernel(x_ref, w1_ref, b1_ref, w2_ref, b2_ref, out_ref, *,
                        width, fused):
    """One batch element per grid step.

    x_ref  : (1, C, H*W) f32   channel-major activation slab (H*W on lanes)
    w1_ref : (C, 9*C)    bf16  conv1 weights, BN1 scale pre-folded
    b1_ref : (C, 1)      f32   BN1 bias
    w2_ref : (C, 9*C)    bf16  conv2 weights, BN2 scale pre-folded
    b2_ref : (C, 1)      f32   BN2 bias
    out_ref: (1, C, H*W) f32
    """
    C, HW = x_ref.shape[1], x_ref.shape[2]
    W = width

    # Column-of-the-image validity masks for the dw=0 / dw=2 taps, built once
    # from an iota over the lane axis and shared by both convs.  Row validity
    # (dh off the top/bottom) is handled by the zero fill in _shift below.
    w_idx = lax.broadcasted_iota(jnp.int32, (1, HW), 1) % W
    left_ok = w_idx >= 1           # tap column w-1 exists
    right_ok = w_idx <= W - 2      # tap column w+1 exists

    def _shift(a, off):
        # y[:, i] = a[:, i + off] if 0 <= i + off < HW else 0.
        # Static lane shift of an in-register slab (XLU-side data movement),
        # zero fill for rows falling off the image.  No VMEM round trip.
        if off == 0:
            return a
        if off > 0:
            pad = jnp.zeros((C, off), a.dtype)
            return jnp.concatenate([a[:, off:], pad], axis=1)
        pad = jnp.zeros((C, -off), a.dtype)
        return jnp.concatenate([pad, a[:, :HW + off]], axis=1)

    def _taps(a):
        ts = []
        for dh in range(3):
            for dw in range(3):
                t = _shift(a, (dh - 1) * W + (dw - 1))
                if dw == 0:
                    t = jnp.where(left_ok, t, 0.0)
                elif dw == 2:
                    t = jnp.where(right_ok, t, 0.0)
                ts.append(t)
        return ts

    def conv3x3(a, w_ref):
        # a: (C, HW) f32  ->  (C, HW) f32 conv output (BN scale already in w).
        ts = _taps(a)
        if fused:
            # One MXU matmul per conv: (C, 9C) @ (9C, HW); single bf16 cast at
            # the MXU boundary, f32 accumulation.
            patch = jnp.concatenate(ts, axis=0).astype(jnp.bfloat16)
            return jnp.dot(w_ref[...], patch, preferred_element_type=jnp.float32)
        # Debug fallback: nine per-tap matmuls (same math, simpler lowering).
        acc = jnp.zeros((C, HW), jnp.float32)
        for t_idx, t in enumerate(ts):
            acc = acc + jnp.dot(w_ref[:, t_idx * C:(t_idx + 1) * C],
                                t.astype(jnp.bfloat16),
                                preferred_element_type=jnp.float32)
        return acc

    x = x_ref[0]                                                   # (C, HW) f32
    h = jnp.maximum(conv3x3(x, w1_ref) + b1_ref[...], 0.0)         # conv1+BN1+ReLU
    h = conv3x3(h, w2_ref) + b2_ref[...]                           # conv2+BN2
    out_ref[0] = jnp.maximum(h + x, 0.0).astype(out_ref.dtype)     # +identity, ReLU


@functools.partial(jax.jit, static_argnames=("fused",))
def basic_block_forward(x_nchw, w1_mat, b1, w2_mat, b2, *, fused=True):
    """x_nchw: (N, C, H, W) f32; w*_mat: (C, 9*C) bf16 (BN scale folded);
    b*: (C,) f32.  Returns (N, C, H, W) f32."""
    N, C, H, W = x_nchw.shape
    HW = H * W
    x_flat = x_nchw.reshape(N, C, HW)       # free reshape: NCHW is contiguous

    kernel = functools.partial(_basic_block_kernel, width=W, fused=fused)
    out = pl.pallas_call(
        kernel,
        out_shape=jax.ShapeDtypeStruct((N, C, HW), jnp.float32),
        grid_spec=pltpu.PrefetchScalarGridSpec(
            num_scalar_prefetch=0,
            grid=(N,),
            in_specs=[
                pl.BlockSpec((1, C, HW), lambda n: (n, 0, 0)),    # x slab
                pl.BlockSpec((C, 9 * C), lambda n: (0, 0)),       # w1 (bf16)
                pl.BlockSpec((C, 1), lambda n: (0, 0)),           # b1
                pl.BlockSpec((C, 9 * C), lambda n: (0, 0)),       # w2 (bf16)
                pl.BlockSpec((C, 1), lambda n: (0, 0)),           # b2
            ],
            out_specs=pl.BlockSpec((1, C, HW), lambda n: (n, 0, 0)),
            # No scratch: padded buffers were eliminated per the perf review.
        ),
        compiler_params=pltpu.CompilerParams(
            dimension_semantics=("parallel",),
            # Explicit limit: above v5e's 16 MiB scoped default, tiny vs. every
            # generation's physical VMEM at these shapes.
            vmem_limit_bytes=32 * 1024 * 1024),
    )(x_flat, w1_mat, b1.reshape(C, 1), w2_mat, b2.reshape(C, 1))
    return out.reshape(N, C, H, W)


def fold_bn(gamma, beta, mean, var, eps=1e-5):
    scale = gamma / jnp.sqrt(var + eps)
    bias = beta - mean * scale
    return scale, bias


def prepare_conv(w_oihw, bn_scale):
    """Fold the BN scale into the conv weight in f32, cast once to bf16, and lay
    out as (C_out, 9*C_in) with columns ordered (dh, dw, c_in) to match the
    kernel's tap ordering.  Also returns the folded OIHW bf16 weight so the
    pure-JAX reference uses numerically identical operands."""
    w_folded = w_oihw * bn_scale[:, None, None, None]
    w_bf = w_folded.astype(jnp.bfloat16)
    w_mat = jnp.transpose(w_bf, (0, 2, 3, 1)).reshape(w_bf.shape[0], -1)
    return w_mat, w_bf


def reference_nchw(x, w1_bf_oihw, b1, w2_bf_oihw, b2):
    """Pure-JAX reference with the same operand precision as the kernel
    (bf16 conv operands, f32 accumulation and elementwise math)."""
    def conv(z, w):
        return lax.conv_general_dilated(
            z.astype(jnp.bfloat16), w, window_strides=(1, 1), padding="SAME",
            dimension_numbers=("NCHW", "OIHW", "NCHW"),
            preferred_element_type=jnp.float32)

    h = jnp.maximum(conv(x, w1_bf_oihw) + b1[None, :, None, None], 0.0)
    h = conv(h, w2_bf_oihw) + b2[None, :, None, None]
    return jnp.maximum(h + x, 0.0)


if __name__ == "__main__":
    # Small shapes consistent with BasicBlock(in_planes=4, planes=4, stride=1).
    N, C, H, W = 2, 4, 16, 16

    key = jax.random.PRNGKey(0)
    ks = jax.random.split(key, 11)

    x = jax.random.normal(ks[0], (N, C, H, W), jnp.float32)

    # Conv weights in PyTorch OIHW layout.
    w1_oihw = jax.random.normal(ks[1], (C, C, 3, 3), jnp.float32) * 0.2
    w2_oihw = jax.random.normal(ks[2], (C, C, 3, 3), jnp.float32) * 0.2

    # BatchNorm (inference mode) parameters, deterministic and non-trivial.
    g1 = 1.0 + 0.1 * jax.random.normal(ks[3], (C,), jnp.float32)
    be1 = 0.1 * jax.random.normal(ks[4], (C,), jnp.float32)
    m1 = 0.1 * jax.random.normal(ks[5], (C,), jnp.float32)
    v1 = jax.random.uniform(ks[6], (C,), jnp.float32, minval=0.5, maxval=1.5)
    g2 = 1.0 + 0.1 * jax.random.normal(ks[7], (C,), jnp.float32)
    be2 = 0.1 * jax.random.normal(ks[8], (C,), jnp.float32)
    m2 = 0.1 * jax.random.normal(ks[9], (C,), jnp.float32)
    v2 = jax.random.uniform(ks[10], (C,), jnp.float32, minval=0.5, maxval=1.5)

    s1, b1 = fold_bn(g1, be1, m1, v1)
    s2, b2 = fold_bn(g2, be2, m2, v2)

    w1_mat, w1_bf = prepare_conv(w1_oihw, s1)
    w2_mat, w2_bf = prepare_conv(w2_oihw, s2)

    try:
        out = jax.block_until_ready(
            basic_block_forward(x, w1_mat, b1, w2_mat, b2, fused=True))
    except Exception:
        # Lowering fallback only: identical math with the fused (9C, HW) patch
        # replaced by nine per-tap matmuls (still scratch-free / retile-free).
        out = jax.block_until_ready(
            basic_block_forward(x, w1_mat, b1, w2_mat, b2, fused=False))

    ref = reference_nchw(x, w1_bf, b1, w2_bf, b2)
    assert out.shape == (N, C, H, W)
    assert jnp.allclose(out, ref, rtol=1e-2, atol=1e-2), "mismatch vs reference"

    print("KERNEL_OK")
</pallas_src>

<mosaic_0001>
module attributes {stable_mosaic.version = 11 : i64} {
  func.func @_basic_block_kernel(%arg0: i32, %arg1: memref<1x4x256xf32, #tpu.memory_space<vmem>>, %arg2: memref<4x36xbf16, #tpu.memory_space<vmem>>, %arg3: memref<4x1xf32, #tpu.memory_space<vmem>>, %arg4: memref<4x36xbf16, #tpu.memory_space<vmem>>, %arg5: memref<4x1xf32, #tpu.memory_space<vmem>>, %arg6: memref<1x4x256xf32, #tpu.memory_space<vmem>>) attributes {dimension_semantics = [#tpu.dimension_semantics<parallel>], iteration_bounds = array<i64: 2>, scalar_prefetch = 0 : i64, scratch_operands = 0 : i64, tpu.core_type = #tpu.core_type<tc>, window_params = [{transform_indices = @transform_0, window_bounds = array<i64: 1, 4, 256>}, {pipeline_mode = #tpu.pipeline_mode<synchronous>, transform_indices = @transform_1, window_bounds = array<i64: 4, 36>}, {pipeline_mode = #tpu.pipeline_mode<synchronous>, transform_indices = @transform_2, window_bounds = array<i64: 4, 1>}, {pipeline_mode = #tpu.pipeline_mode<synchronous>, transform_indices = @transform_3, window_bounds = array<i64: 4, 36>}, {pipeline_mode = #tpu.pipeline_mode<synchronous>, transform_indices = @transform_4, window_bounds = array<i64: 4, 1>}, {transform_indices = @transform_5, window_bounds = array<i64: 1, 4, 256>}]} {
    %0 = tpu.iota {dimensions = array<i32: 1>} : vector<1x256xi32>
    %c16_i32 = arith.constant 16 : i32
    %c0_i32 = arith.constant 0 : i32
    %1 = arith.cmpi eq, %c16_i32, %c0_i32 : i32
    %c1_i32 = arith.constant 1 : i32
    %2 = arith.select %1, %c1_i32, %c16_i32 : i32
    %3 = vector.broadcast %2 : i32 to vector<1x256xi32>
    %4 = arith.remsi %0, %3 : vector<1x256xi32>
    %c0_i32_0 = arith.constant 0 : i32
    %5 = vector.broadcast %c0_i32_0 : i32 to vector<1x256xi32>
    %6 = arith.cmpi ne, %4, %5 : vector<1x256xi32>
    %c0_i32_1 = arith.constant 0 : i32
    %7 = vector.broadcast %c0_i32_1 : i32 to vector<1x256xi32>
    %8 = arith.cmpi slt, %4, %7 : vector<1x256xi32>
    %c0_i32_2 = arith.constant 0 : i32
    %9 = arith.cmpi slt, %2, %c0_i32_2 : i32
    %10 = vector.broadcast %9 : i1 to vector<1x256xi1>
    %11 = vector.broadcast %10 : vector<1x256xi1> to vector<1x256xi1>
    %12 = arith.xori %8, %11 : vector<1x256xi1>
    %13 = arith.andi %12, %6 : vector<1x256xi1>
    %14 = vector.broadcast %2 : i32 to vector<1x256xi32>
    %15 = arith.addi %4, %14 : vector<1x256xi32>
    %16 = arith.select %13, %15, %4 : vector<1x256xi1>, vector<1x256xi32>
    %c1_i32_3 = arith.constant 1 : i32
    %17 = vector.broadcast %c1_i32_3 : i32 to vector<1x256xi32>
    %18 = arith.cmpi sge, %16, %17 : vector<1x256xi32>
    %c14_i32 = arith.constant 14 : i32
    %19 = vector.broadcast %c14_i32 : i32 to vector<1x256xi32>
    %20 = arith.cmpi sle, %16, %19 : vector<1x256xi32>
    %c0 = arith.constant 0 : index
    %c0_4 = arith.constant 0 : index
    %c0_5 = arith.constant 0 : index
    %21 = vector.load %arg1[%c0, %c0_4, %c0_5] : memref<1x4x256xf32, #tpu.memory_space<vmem>>, vector<1x4x256xf32>
    %22 = vector.shape_cast %21 : vector<1x4x256xf32> to vector<4x256xf32>
    %cst = arith.constant 0.000000e+00 : f32
    %23 = vector.broadcast %cst : f32 to vector<4x17xf32>
    %24 = vector.extract_strided_slice %22 {offsets = [0, 0], sizes = [4, 239], strides = [1, 1]} : vector<4x256xf32> to vector<4x239xf32>
    %25 = tpu.concatenate %23, %24 in 1 : vector<4x17xf32>, vector<4x239xf32> -> vector<4x256xf32>
    %cst_6 = arith.constant 0.000000e+00 : f32
    %26 = vector.shape_cast %18 : vector<1x256xi1> to vector<1x256xi1>
    %27 = vector.broadcast %26 : vector<1x256xi1> to vector<4x256xi1>
    %28 = vector.broadcast %cst_6 : f32 to vector<4x256xf32>
    %29 = arith.select %27, %25, %28 : vector<4x256xi1>, vector<4x256xf32>
    %cst_7 = arith.constant 0.000000e+00 : f32
    %30 = vector.broadcast %cst_7 : f32 to vector<4x16xf32>
    %31 = vector.extract_strided_slice %22 {offsets = [0, 0], sizes = [4, 240], strides = [1, 1]} : vector<4x256xf32> to vector<4x240xf32>
    %32 = tpu.concatenate %30, %31 in 1 : vector<4x16xf32>, vector<4x240xf32> -> vector<4x256xf32>
    %cst_8 = arith.constant 0.000000e+00 : f32
    %33 = vector.broadcast %cst_8 : f32 to vector<4x15xf32>
    %34 = vector.extract_strided_slice %22 {offsets = [0, 0], sizes = [4, 241], strides = [1, 1]} : vector<4x256xf32> to vector<4x241xf32>
    %35 = tpu.concatenate %33, %34 in 1 : vector<4x15xf32>, vector<4x241xf32> -> vector<4x256xf32>
    %cst_9 = arith.constant 0.000000e+00 : f32
    %36 = vector.shape_cast %20 : vector<1x256xi1> to vector<1x256xi1>
    %37 = vector.broadcast %36 : vector<1x256xi1> to vector<4x256xi1>
    %38 = vector.broadcast %cst_9 : f32 to vector<4x256xf32>
    %39 = arith.select %37, %35, %38 : vector<4x256xi1>, vector<4x256xf32>
    %cst_10 = arith.constant 0.000000e+00 : f32
    %40 = vector.broadcast %cst_10 : f32 to vector<4x1xf32>
    %41 = vector.extract_strided_slice %22 {offsets = [0, 0], sizes = [4, 255], strides = [1, 1]} : vector<4x256xf32> to vector<4x255xf32>
    %42 = tpu.concatenate %40, %41 in 1 : vector<4x1xf32>, vector<4x255xf32> -> vector<4x256xf32>
    %cst_11 = arith.constant 0.000000e+00 : f32
    %43 = vector.shape_cast %18 : vector<1x256xi1> to vector<1x256xi1>
    %44 = vector.broadcast %43 : vector<1x256xi1> to vector<4x256xi1>
    %45 = vector.broadcast %cst_11 : f32 to vector<4x256xf32>
    %46 = arith.select %44, %42, %45 : vector<4x256xi1>, vector<4x256xf32>
    %cst_12 = arith.constant 0.000000e+00 : f32
    %47 = vector.broadcast %cst_12 : f32 to vector<4x1xf32>
    %48 = vector.extract_strided_slice %22 {offsets = [0, 1], sizes = [4, 255], strides = [1, 1]} : vector<4x256xf32> to vector<4x255xf32>
    %49 = tpu.concatenate %48, %47 in 1 : vector<4x255xf32>, vector<4x1xf32> -> vector<4x256xf32>
    %cst_13 = arith.constant 0.000000e+00 : f32
    %50 = vector.shape_cast %20 : vector<1x256xi1> to vector<1x256xi1>
    %51 = vector.broadcast %50 : vector<1x256xi1> to vector<4x256xi1>
    %52 = vector.broadcast %cst_13 : f32 to vector<4x256xf32>
    %53 = arith.select %51, %49, %52 : vector<4x256xi1>, vector<4x256xf32>
    %cst_14 = arith.constant 0.000000e+00 : f32
    %54 = vector.broadcast %cst_14 : f32 to vector<4x15xf32>
    %55 = vector.extract_strided_slice %22 {offsets = [0, 15], sizes = [4, 241], strides = [1, 1]} : vector<4x256xf32> to vector<4x241xf32>
    %56 = tpu.concatenate %55, %54 in 1 : vector<4x241xf32>, vector<4x15xf32> -> vector<4x256xf32>
    %cst_15 = arith.constant 0.000000e+00 : f32
    %57 = vector.shape_cast %18 : vector<1x256xi1> to vector<1x256xi1>
    %58 = vector.broadcast %57 : vector<1x256xi1> to vector<4x256xi1>
    %59 = vector.broadcast %cst_15 : f32 to vector<4x256xf32>
    %60 = arith.select %58, %56, %59 : vector<4x256xi1>, vector<4x256xf32>
    %cst_16 = arith.constant 0.000000e+00 : f32
    %61 = vector.broadcast %cst_16 : f32 to vector<4x16xf32>
    %62 = vector.extract_strided_slice %22 {offsets = [0, 16], sizes = [4, 240], strides = [1, 1]} : vector<4x256xf32> to vector<4x240xf32>
    %63 = tpu.concatenate %62, %61 in 1 : vector<4x240xf32>, vector<4x16xf32> -> vector<4x256xf32>
    %cst_17 = arith.constant 0.000000e+00 : f32
    %64 = vector.broadcast %cst_17 : f32 to vector<4x17xf32>
    %65 = vector.extract_strided_slice %22 {offsets = [0, 17], sizes = [4, 239], strides = [1, 1]} : vector<4x256xf32> to vector<4x239xf32>
    %66 = tpu.concatenate %65, %64 in 1 : vector<4x239xf32>, vector<4x17xf32> -> vector<4x256xf32>
    %cst_18 = arith.constant 0.000000e+00 : f32
    %67 = vector.shape_cast %20 : vector<1x256xi1> to vector<1x256xi1>
    %68 = vector.broadcast %67 : vector<1x256xi1> to vector<4x256xi1>
    %69 = vector.broadcast %cst_18 : f32 to vector<4x256xf32>
    %70 = arith.select %68, %66, %69 : vector<4x256xi1>, vector<4x256xf32>
    %71 = tpu.concatenate %29, %32, %39, %46, %22, %53, %60, %63, %70 in 0 : vector<4x256xf32>, vector<4x256xf32>, vector<4x256xf32>, vector<4x256xf32>, vector<4x256xf32>, vector<4x256xf32>, vector<4x256xf32>, vector<4x256xf32>, vector<4x256xf32> -> vector<36x256xf32>
    %72 = arith.truncf %71 : vector<36x256xf32> to vector<36x256xbf16>
    %c0_19 = arith.constant 0 : index
    %c0_20 = arith.constant 0 : index
    %73 = vector.load %arg2[%c0_19, %c0_20] : memref<4x36xbf16, #tpu.memory_space<vmem>>, vector<4x36xbf16>
    %cst_21 = arith.constant dense<0.000000e+00> : vector<4x256xf32>
    %74 = tpu.matmul %73, %72, %cst_21 {dimension_numbers = #tpu.dot_dimension_numbers<[1], [0], [0], [1], [0, 0, 1, 1], [], []>} : vector<4x36xbf16>, vector<36x256xbf16>, vector<4x256xf32> -> vector<4x256xf32>
    %c0_22 = arith.constant 0 : index
    %c0_23 = arith.constant 0 : index
    %75 = vector.load %arg3[%c0_22, %c0_23] : memref<4x1xf32, #tpu.memory_space<vmem>>, vector<4x1xf32>
    %76 = vector.broadcast %75 : vector<4x1xf32> to vector<4x256xf32>
    %77 = arith.addf %74, %76 : vector<4x256xf32>
    %cst_24 = arith.constant 0.000000e+00 : f32
    %78 = vector.broadcast %cst_24 : f32 to vector<4x256xf32>
    %79 = arith.maximumf %77, %78 : vector<4x256xf32>
    %cst_25 = arith.constant 0.000000e+00 : f32
    %80 = vector.broadcast %cst_25 : f32 to vector<4x17xf32>
    %81 = vector.extract_strided_slice %79 {offsets = [0, 0], sizes = [4, 239], strides = [1, 1]} : vector<4x256xf32> to vector<4x239xf32>
    %82 = tpu.concatenate %80, %81 in 1 : vector<4x17xf32>, vector<4x239xf32> -> vector<4x256xf32>
    %cst_26 = arith.constant 0.000000e+00 : f32
    %83 = vector.shape_cast %18 : vector<1x256xi1> to vector<1x256xi1>
    %84 = vector.broadcast %83 : vector<1x256xi1> to vector<4x256xi1>
    %85 = vector.broadcast %cst_26 : f32 to vector<4x256xf32>
    %86 = arith.select %84, %82, %85 : vector<4x256xi1>, vector<4x256xf32>
    %cst_27 = arith.constant 0.000000e+00 : f32
    %87 = vector.broadcast %cst_27 : f32 to vector<4x16xf32>
    %88 = vector.extract_strided_slice %79 {offsets = [0, 0], sizes = [4, 240], strides = [1, 1]} : vector<4x256xf32> to vector<4x240xf32>
    %89 = tpu.concatenate %87, %88 in 1 : vector<4x16xf32>, vector<4x240xf32> -> vector<4x256xf32>
    %cst_28 = arith.constant 0.000000e+00 : f32
    %90 = vector.broadcast %cst_28 : f32 to vector<4x15xf32>
    %91 = vector.extract_strided_slice %79 {offsets = [0, 0], sizes = [4, 241], strides = [1, 1]} : vector<4x256xf32> to vector<4x241xf32>
    %92 = tpu.concatenate %90, %91 in 1 : vector<4x15xf32>, vector<4x241xf32> -> vector<4x256xf32>
    %cst_29 = arith.constant 0.000000e+00 : f32
    %93 = vector.shape_cast %20 : vector<1x256xi1> to vector<1x256xi1>
    %94 = vector.broadcast %93 : vector<1x256xi1> to vector<4x256xi1>
    %95 = vector.broadcast %cst_29 : f32 to vector<4x256xf32>
    %96 = arith.select %94, %92, %95 : vector<4x256xi1>, vector<4x256xf32>
    %cst_30 = arith.constant 0.000000e+00 : f32
    %97 = vector.broadcast %cst_30 : f32 to vector<4x1xf32>
    %98 = vector.extract_strided_slice %79 {offsets = [0, 0], sizes = [4, 255], strides = [1, 1]} : vector<4x256xf32> to vector<4x255xf32>
    %99 = tpu.concatenate %97, %98 in 1 : vector<4x1xf32>, vector<4x255xf32> -> vector<4x256xf32>
    %cst_31 = arith.constant 0.000000e+00 : f32
    %100 = vector.shape_cast %18 : vector<1x256xi1> to vector<1x256xi1>
    %101 = vector.broadcast %100 : vector<1x256xi1> to vector<4x256xi1>
    %102 = vector.broadcast %cst_31 : f32 to vector<4x256xf32>
    %103 = arith.select %101, %99, %102 : vector<4x256xi1>, vector<4x256xf32>
    %cst_32 = arith.constant 0.000000e+00 : f32
    %104 = vector.broadcast %cst_32 : f32 to vector<4x1xf32>
    %105 = vector.extract_strided_slice %79 {offsets = [0, 1], sizes = [4, 255], strides = [1, 1]} : vector<4x256xf32> to vector<4x255xf32>
    %106 = tpu.concatenate %105, %104 in 1 : vector<4x255xf32>, vector<4x1xf32> -> vector<4x256xf32>
    %cst_33 = arith.constant 0.000000e+00 : f32
    %107 = vector.shape_cast %20 : vector<1x256xi1> to vector<1x256xi1>
    %108 = vector.broadcast %107 : vector<1x256xi1> to vector<4x256xi1>
    %109 = vector.broadcast %cst_33 : f32 to vector<4x256xf32>
    %110 = arith.select %108, %106, %109 : vector<4x256xi1>, vector<4x256xf32>
    %cst_34 = arith.constant 0.000000e+00 : f32
    %111 = vector.broadcast %cst_34 : f32 to vector<4x15xf32>
    %112 = vector.extract_strided_slice %79 {offsets = [0, 15], sizes = [4, 241], strides = [1, 1]} : vector<4x256xf32> to vector<4x241xf32>
    %113 = tpu.concatenate %112, %111 in 1 : vector<4x241xf32>, vector<4x15xf32> -> vector<4x256xf32>
    %cst_35 = arith.constant 0.000000e+00 : f32
    %114 = vector.shape_cast %18 : vector<1x256xi1> to vector<1x256xi1>
    %115 = vector.broadcast %114 : vector<1x256xi1> to vector<4x256xi1>
    %116 = vector.broadcast %cst_35 : f32 to vector<4x256xf32>
    %117 = arith.select %115, %113, %116 : vector<4x256xi1>, vector<4x256xf32>
    %cst_36 = arith.constant 0.000000e+00 : f32
    %118 = vector.broadcast %cst_36 : f32 to vector<4x16xf32>
    %119 = vector.extract_strided_slice %79 {offsets = [0, 16], sizes = [4, 240], strides = [1, 1]} : vector<4x256xf32> to vector<4x240xf32>
    %120 = tpu.concatenate %119, %118 in 1 : vector<4x240xf32>, vector<4x16xf32> -> vector<4x256xf32>
    %cst_37 = arith.constant 0.000000e+00 : f32
    %121 = vector.broadcast %cst_37 : f32 to vector<4x17xf32>
    %122 = vector.extract_strided_slice %79 {offsets = [0, 17], sizes = [4, 239], strides = [1, 1]} : vector<4x256xf32> to vector<4x239xf32>
    %123 = tpu.concatenate %122, %121 in 1 : vector<4x239xf32>, vector<4x17xf32> -> vector<4x256xf32>
    %cst_38 = arith.constant 0.000000e+00 : f32
    %124 = vector.shape_cast %20 : vector<1x256xi1> to vector<1x256xi1>
    %125 = vector.broadcast %124 : vector<1x256xi1> to vector<4x256xi1>
    %126 = vector.broadcast %cst_38 : f32 to vector<4x256xf32>
    %127 = arith.select %125, %123, %126 : vector<4x256xi1>, vector<4x256xf32>
    %128 = tpu.concatenate %86, %89, %96, %103, %79, %110, %117, %120, %127 in 0 : vector<4x256xf32>, vector<4x256xf32>, vector<4x256xf32>, vector<4x256xf32>, vector<4x256xf32>, vector<4x256xf32>, vector<4x256xf32>, vector<4x256xf32>, vector<4x256xf32> -> vector<36x256xf32>
    %129 = arith.truncf %128 : vector<36x256xf32> to vector<36x256xbf16>
    %c0_39 = arith.constant 0 : index
    %c0_40 = arith.constant 0 : index
    %130 = vector.load %arg4[%c0_39, %c0_40] : memref<4x36xbf16, #tpu.memory_space<vmem>>, vector<4x36xbf16>
    %cst_41 = arith.constant dense<0.000000e+00> : vector<4x256xf32>
    %131 = tpu.matmul %130, %129, %cst_41 {dimension_numbers = #tpu.dot_dimension_numbers<[1], [0], [0], [1], [0, 0, 1, 1], [], []>} : vector<4x36xbf16>, vector<36x256xbf16>, vector<4x256xf32> -> vector<4x256xf32>
    %c0_42 = arith.constant 0 : index
    %c0_43 = arith.constant 0 : index
    %132 = vector.load %arg5[%c0_42, %c0_43] : memref<4x1xf32, #tpu.memory_space<vmem>>, vector<4x1xf32>
    %133 = vector.broadcast %132 : vector<4x1xf32> to vector<4x256xf32>
    %134 = arith.addf %131, %133 : vector<4x256xf32>
    %135 = arith.addf %134, %22 : vector<4x256xf32>
    %cst_44 = arith.constant 0.000000e+00 : f32
    %136 = vector.broadcast %cst_44 : f32 to vector<4x256xf32>
    %137 = arith.maximumf %135, %136 : vector<4x256xf32>
    %c0_45 = arith.constant 0 : index
    %c0_46 = arith.constant 0 : index
    %c0_47 = arith.constant 0 : index
    %138 = vector.load %arg6[%c0_45, %c0_46, %c0_47] : memref<1x4x256xf32, #tpu.memory_space<vmem>>, vector<1x4x256xf32>
    %139 = vector.shape_cast %138 : vector<1x4x256xf32> to vector<4x256xf32>
    %140 = vector.shape_cast %137 : vector<4x256xf32> to vector<1x4x256xf32>
    tpu.vector_store %arg6[%c0_45, %c0_46, %c0_47], %140 {strides = array<i32>} : memref<1x4x256xf32, #tpu.memory_space<vmem>>, vector<1x4x256xf32>,
    return
  }
  func.func @transform_0(%arg0: i32) -> (i32, i32, i32) {
    %c0_i32 = arith.constant 0 : i32
    %c0_i32_0 = arith.constant 0 : i32
    %c0_i32_1 = arith.constant 0 : i32
    return %arg0, %c0_i32, %c0_i32_0 : i32, i32, i32
  }
  func.func @transform_1(%arg0: i32) -> (i32, i32) {
    %c0_i32 = arith.constant 0 : i32
    %c0_i32_0 = arith.constant 0 : i32
    %c0_i32_1 = arith.constant 0 : i32
    return %c0_i32, %c0_i32_0 : i32, i32
  }
  func.func @transform_2(%arg0: i32) -> (i32, i32) {
    %c0_i32 = arith.constant 0 : i32
    %c0_i32_0 = arith.constant 0 : i32
    %c0_i32_1 = arith.constant 0 : i32
    return %c0_i32, %c0_i32_0 : i32, i32
  }
  func.func @transform_3(%arg0: i32) -> (i32, i32) {
    %c0_i32 = arith.constant 0 : i32
    %c0_i32_0 = arith.constant 0 : i32
    %c0_i32_1 = arith.constant 0 : i32
    return %c0_i32, %c0_i32_0 : i32, i32
  }
  func.func @transform_4(%arg0: i32) -> (i32, i32) {
    %c0_i32 = arith.constant 0 : i32
    %c0_i32_0 = arith.constant 0 : i32
    %c0_i32_1 = arith.constant 0 : i32
    return %c0_i32, %c0_i32_0 : i32, i32
  }
  func.func @transform_5(%arg0: i32) -> (i32, i32, i32) {
    %c0_i32 = arith.constant 0 : i32
    %c0_i32_0 = arith.constant 0 : i32
    %c0_i32_1 = arith.constant 0 : i32
    return %arg0, %c0_i32, %c0_i32_0 : i32, i32, i32
  }
}

module attributes {stable_mosaic.version = 11 : i64} {
  func.func @_basic_block_kernel(%arg0: i32, %arg1: memref<1x4x256xf32, #tpu.memory_space<vmem>>, %arg2: memref<4x36xbf16, #tpu.memory_space<vmem>>, %arg3: memref<4x1xf32, #tpu.memory_space<vmem>>, %arg4: memref<4x36xbf16, #tpu.memory_space<vmem>>, %arg5: memref<4x1xf32, #tpu.memory_space<vmem>>, %arg6: memref<1x4x256xf32, #tpu.memory_space<vmem>>) attributes {dimension_semantics = [#tpu.dimension_semantics<parallel>], iteration_bounds = array<i64: 2>, scalar_prefetch = 0 : i64, scratch_operands = 0 : i64, tpu.core_type = #tpu.core_type<tc>, window_params = [{transform_indices = @transform_0, window_bounds = array<i64: 1, 4, 256>}, {pipeline_mode = #tpu.pipeline_mode<synchronous>, transform_indices = @transform_1, window_bounds = array<i64: 4, 36>}, {pipeline_mode = #tpu.pipeline_mode<synchronous>, transform_indices = @transform_2, window_bounds = array<i64: 4, 1>}, {pipeline_mode = #tpu.pipeline_mode<synchronous>, transform_indices = @transform_3, window_bounds = array<i64: 4, 36>}, {pipeline_mode = #tpu.pipeline_mode<synchronous>, transform_indices = @transform_4, window_bounds = array<i64: 4, 1>}, {transform_indices = @transform_5, window_bounds = array<i64: 1, 4, 256>}]} {
    %0 = tpu.iota {dimensions = array<i32: 1>} : vector<1x256xi32>
    %c16_i32 = arith.constant 16 : i32
    %c0_i32 = arith.constant 0 : i32
    %1 = arith.cmpi eq, %c16_i32, %c0_i32 : i32
    %c1_i32 = arith.constant 1 : i32
    %2 = arith.select %1, %c1_i32, %c16_i32 : i32
    %3 = vector.broadcast %2 : i32 to vector<1x256xi32>
    %4 = arith.remsi %0, %3 : vector<1x256xi32>
    %c0_i32_0 = arith.constant 0 : i32
    %5 = vector.broadcast %c0_i32_0 : i32 to vector<1x256xi32>
    %6 = arith.cmpi ne, %4, %5 : vector<1x256xi32>
    %c0_i32_1 = arith.constant 0 : i32
    %7 = vector.broadcast %c0_i32_1 : i32 to vector<1x256xi32>
    %8 = arith.cmpi slt, %4, %7 : vector<1x256xi32>
    %c0_i32_2 = arith.constant 0 : i32
    %9 = arith.cmpi slt, %2, %c0_i32_2 : i32
    %10 = vector.broadcast %9 : i1 to vector<1x256xi1>
    %11 = vector.broadcast %10 : vector<1x256xi1> to vector<1x256xi1>
    %12 = arith.xori %8, %11 : vector<1x256xi1>
    %13 = arith.andi %12, %6 : vector<1x256xi1>
    %14 = vector.broadcast %2 : i32 to vector<1x256xi32>
    %15 = arith.addi %4, %14 : vector<1x256xi32>
    %16 = arith.select %13, %15, %4 : vector<1x256xi1>, vector<1x256xi32>
    %c1_i32_3 = arith.constant 1 : i32
    %17 = vector.broadcast %c1_i32_3 : i32 to vector<1x256xi32>
    %18 = arith.cmpi sge, %16, %17 : vector<1x256xi32>
    %c14_i32 = arith.constant 14 : i32
    %19 = vector.broadcast %c14_i32 : i32 to vector<1x256xi32>
    %20 = arith.cmpi sle, %16, %19 : vector<1x256xi32>
    %c0 = arith.constant 0 : index
    %c0_4 = arith.constant 0 : index
    %c0_5 = arith.constant 0 : index
    %21 = vector.load %arg1[%c0, %c0_4, %c0_5] : memref<1x4x256xf32, #tpu.memory_space<vmem>>, vector<1x4x256xf32>
    %22 = vector.shape_cast %21 : vector<1x4x256xf32> to vector<4x256xf32>
    %cst = arith.constant 0.000000e+00 : f32
    %23 = vector.broadcast %cst : f32 to vector<4x17xf32>
    %24 = vector.extract_strided_slice %22 {offsets = [0, 0], sizes = [4, 239], strides = [1, 1]} : vector<4x256xf32> to vector<4x239xf32>
    %25 = tpu.concatenate %23, %24 in 1 : vector<4x17xf32>, vector<4x239xf32> -> vector<4x256xf32>
    %cst_6 = arith.constant 0.000000e+00 : f32
    %26 = vector.shape_cast %18 : vector<1x256xi1> to vector<1x256xi1>
    %27 = vector.broadcast %26 : vector<1x256xi1> to vector<4x256xi1>
    %28 = vector.broadcast %cst_6 : f32 to vector<4x256xf32>
    %29 = arith.select %27, %25, %28 : vector<4x256xi1>, vector<4x256xf32>
    %cst_7 = arith.constant 0.000000e+00 : f32
    %30 = vector.broadcast %cst_7 : f32 to vector<4x16xf32>
    %31 = vector.extract_strided_slice %22 {offsets = [0, 0], sizes = [4, 240], strides = [1, 1]} : vector<4x256xf32> to vector<4x240xf32>
    %32 = tpu.concatenate %30, %31 in 1 : vector<4x16xf32>, vector<4x240xf32> -> vector<4x256xf32>
    %cst_8 = arith.constant 0.000000e+00 : f32
    %33 = vector.broadcast %cst_8 : f32 to vector<4x15xf32>
    %34 = vector.extract_strided_slice %22 {offsets = [0, 0], sizes = [4, 241], strides = [1, 1]} : vector<4x256xf32> to vector<4x241xf32>
    %35 = tpu.concatenate %33, %34 in 1 : vector<4x15xf32>, vector<4x241xf32> -> vector<4x256xf32>
    %cst_9 = arith.constant 0.000000e+00 : f32
    %36 = vector.shape_cast %20 : vector<1x256xi1> to vector<1x256xi1>
    %37 = vector.broadcast %36 : vector<1x256xi1> to vector<4x256xi1>
    %38 = vector.broadcast %cst_9 : f32 to vector<4x256xf32>
    %39 = arith.select %37, %35, %38 : vector<4x256xi1>, vector<4x256xf32>
    %cst_10 = arith.constant 0.000000e+00 : f32
    %40 = vector.broadcast %cst_10 : f32 to vector<4x1xf32>
    %41 = vector.extract_strided_slice %22 {offsets = [0, 0], sizes = [4, 255], strides = [1, 1]} : vector<4x256xf32> to vector<4x255xf32>
    %42 = tpu.concatenate %40, %41 in 1 : vector<4x1xf32>, vector<4x255xf32> -> vector<4x256xf32>
    %cst_11 = arith.constant 0.000000e+00 : f32
    %43 = vector.shape_cast %18 : vector<1x256xi1> to vector<1x256xi1>
    %44 = vector.broadcast %43 : vector<1x256xi1> to vector<4x256xi1>
    %45 = vector.broadcast %cst_11 : f32 to vector<4x256xf32>
    %46 = arith.select %44, %42, %45 : vector<4x256xi1>, vector<4x256xf32>
    %cst_12 = arith.constant 0.000000e+00 : f32
    %47 = vector.broadcast %cst_12 : f32 to vector<4x1xf32>
    %48 = vector.extract_strided_slice %22 {offsets = [0, 1], sizes = [4, 255], strides = [1, 1]} : vector<4x256xf32> to vector<4x255xf32>
    %49 = tpu.concatenate %48, %47 in 1 : vector<4x255xf32>, vector<4x1xf32> -> vector<4x256xf32>
    %cst_13 = arith.constant 0.000000e+00 : f32
    %50 = vector.shape_cast %20 : vector<1x256xi1> to vector<1x256xi1>
    %51 = vector.broadcast %50 : vector<1x256xi1> to vector<4x256xi1>
    %52 = vector.broadcast %cst_13 : f32 to vector<4x256xf32>
    %53 = arith.select %51, %49, %52 : vector<4x256xi1>, vector<4x256xf32>
    %cst_14 = arith.constant 0.000000e+00 : f32
    %54 = vector.broadcast %cst_14 : f32 to vector<4x15xf32>
    %55 = vector.extract_strided_slice %22 {offsets = [0, 15], sizes = [4, 241], strides = [1, 1]} : vector<4x256xf32> to vector<4x241xf32>
    %56 = tpu.concatenate %55, %54 in 1 : vector<4x241xf32>, vector<4x15xf32> -> vector<4x256xf32>
    %cst_15 = arith.constant 0.000000e+00 : f32
    %57 = vector.shape_cast %18 : vector<1x256xi1> to vector<1x256xi1>
    %58 = vector.broadcast %57 : vector<1x256xi1> to vector<4x256xi1>
    %59 = vector.broadcast %cst_15 : f32 to vector<4x256xf32>
    %60 = arith.select %58, %56, %59 : vector<4x256xi1>, vector<4x256xf32>
    %cst_16 = arith.constant 0.000000e+00 : f32
    %61 = vector.broadcast %cst_16 : f32 to vector<4x16xf32>
    %62 = vector.extract_strided_slice %22 {offsets = [0, 16], sizes = [4, 240], strides = [1, 1]} : vector<4x256xf32> to vector<4x240xf32>
    %63 = tpu.concatenate %62, %61 in 1 : vector<4x240xf32>, vector<4x16xf32> -> vector<4x256xf32>
    %cst_17 = arith.constant 0.000000e+00 : f32
    %64 = vector.broadcast %cst_17 : f32 to vector<4x17xf32>
    %65 = vector.extract_strided_slice %22 {offsets = [0, 17], sizes = [4, 239], strides = [1, 1]} : vector<4x256xf32> to vector<4x239xf32>
    %66 = tpu.concatenate %65, %64 in 1 : vector<4x239xf32>, vector<4x17xf32> -> vector<4x256xf32>
    %cst_18 = arith.constant 0.000000e+00 : f32
    %67 = vector.shape_cast %20 : vector<1x256xi1> to vector<1x256xi1>
    %68 = vector.broadcast %67 : vector<1x256xi1> to vector<4x256xi1>
    %69 = vector.broadcast %cst_18 : f32 to vector<4x256xf32>
    %70 = arith.select %68, %66, %69 : vector<4x256xi1>, vector<4x256xf32>
    %cst_19 = arith.constant 0.000000e+00 : f32
    %71 = vector.broadcast %cst_19 : f32 to vector<4x256xf32>
    %c0_20 = arith.constant 0 : index
    %c0_21 = arith.constant 0 : index
    %72 = vector.load %arg2[%c0_20, %c0_21] : memref<4x36xbf16, #tpu.memory_space<vmem>>, vector<4x4xbf16>
    %73 = arith.truncf %29 : vector<4x256xf32> to vector<4x256xbf16>
    %cst_22 = arith.constant dense<0.000000e+00> : vector<4x256xf32>
    %74 = tpu.matmul %72, %73, %cst_22 {dimension_numbers = #tpu.dot_dimension_numbers<[1], [0], [0], [1], [0, 0, 1, 1], [], []>} : vector<4x4xbf16>, vector<4x256xbf16>, vector<4x256xf32> -> vector<4x256xf32>
    %75 = arith.addf %71, %74 : vector<4x256xf32>
    %c0_23 = arith.constant 0 : index
    %c4 = arith.constant 4 : index
    %76 = vector.load %arg2[%c0_23, %c4] : memref<4x36xbf16, #tpu.memory_space<vmem>>, vector<4x4xbf16>
    %77 = arith.truncf %32 : vector<4x256xf32> to vector<4x256xbf16>
    %cst_24 = arith.constant dense<0.000000e+00> : vector<4x256xf32>
    %78 = tpu.matmul %76, %77, %cst_24 {dimension_numbers = #tpu.dot_dimension_numbers<[1], [0], [0], [1], [0, 0, 1, 1], [], []>} : vector<4x4xbf16>, vector<4x256xbf16>, vector<4x256xf32> -> vector<4x256xf32>
    %79 = arith.addf %75, %78 : vector<4x256xf32>
    %c0_25 = arith.constant 0 : index
    %c8 = arith.constant 8 : index
    %80 = vector.load %arg2[%c0_25, %c8] : memref<4x36xbf16, #tpu.memory_space<vmem>>, vector<4x4xbf16>
    %81 = arith.truncf %39 : vector<4x256xf32> to vector<4x256xbf16>
    %cst_26 = arith.constant dense<0.000000e+00> : vector<4x256xf32>
    %82 = tpu.matmul %80, %81, %cst_26 {dimension_numbers = #tpu.dot_dimension_numbers<[1], [0], [0], [1], [0, 0, 1, 1], [], []>} : vector<4x4xbf16>, vector<4x256xbf16>, vector<4x256xf32> -> vector<4x256xf32>
    %83 = arith.addf %79, %82 : vector<4x256xf32>
    %c0_27 = arith.constant 0 : index
    %c12 = arith.constant 12 : index
    %84 = vector.load %arg2[%c0_27, %c12] : memref<4x36xbf16, #tpu.memory_space<vmem>>, vector<4x4xbf16>
    %85 = arith.truncf %46 : vector<4x256xf32> to vector<4x256xbf16>
    %cst_28 = arith.constant dense<0.000000e+00> : vector<4x256xf32>
    %86 = tpu.matmul %84, %85, %cst_28 {dimension_numbers = #tpu.dot_dimension_numbers<[1], [0], [0], [1], [0, 0, 1, 1], [], []>} : vector<4x4xbf16>, vector<4x256xbf16>, vector<4x256xf32> -> vector<4x256xf32>
    %87 = arith.addf %83, %86 : vector<4x256xf32>
    %c0_29 = arith.constant 0 : index
    %c16 = arith.constant 16 : index
    %88 = vector.load %arg2[%c0_29, %c16] : memref<4x36xbf16, #tpu.memory_space<vmem>>, vector<4x4xbf16>
    %89 = arith.truncf %22 : vector<4x256xf32> to vector<4x256xbf16>
    %cst_30 = arith.constant dense<0.000000e+00> : vector<4x256xf32>
    %90 = tpu.matmul %88, %89, %cst_30 {dimension_numbers = #tpu.dot_dimension_numbers<[1], [0], [0], [1], [0, 0, 1, 1], [], []>} : vector<4x4xbf16>, vector<4x256xbf16>, vector<4x256xf32> -> vector<4x256xf32>
    %91 = arith.addf %87, %90 : vector<4x256xf32>
    %c0_31 = arith.constant 0 : index
    %c20 = arith.constant 20 : index
    %92 = vector.load %arg2[%c0_31, %c20] : memref<4x36xbf16, #tpu.memory_space<vmem>>, vector<4x4xbf16>
    %93 = arith.truncf %53 : vector<4x256xf32> to vector<4x256xbf16>
    %cst_32 = arith.constant dense<0.000000e+00> : vector<4x256xf32>
    %94 = tpu.matmul %92, %93, %cst_32 {dimension_numbers = #tpu.dot_dimension_numbers<[1], [0], [0], [1], [0, 0, 1, 1], [], []>} : vector<4x4xbf16>, vector<4x256xbf16>, vector<4x256xf32> -> vector<4x256xf32>
    %95 = arith.addf %91, %94 : vector<4x256xf32>
    %c0_33 = arith.constant 0 : index
    %c24 = arith.constant 24 : index
    %96 = vector.load %arg2[%c0_33, %c24] : memref<4x36xbf16, #tpu.memory_space<vmem>>, vector<4x4xbf16>
    %97 = arith.truncf %60 : vector<4x256xf32> to vector<4x256xbf16>
    %cst_34 = arith.constant dense<0.000000e+00> : vector<4x256xf32>
    %98 = tpu.matmul %96, %97, %cst_34 {dimension_numbers = #tpu.dot_dimension_numbers<[1], [0], [0], [1], [0, 0, 1, 1], [], []>} : vector<4x4xbf16>, vector<4x256xbf16>, vector<4x256xf32> -> vector<4x256xf32>
    %99 = arith.addf %95, %98 : vector<4x256xf32>
    %c0_35 = arith.constant 0 : index
    %c28 = arith.constant 28 : index
    %100 = vector.load %arg2[%c0_35, %c28] : memref<4x36xbf16, #tpu.memory_space<vmem>>, vector<4x4xbf16>
    %101 = arith.truncf %63 : vector<4x256xf32> to vector<4x256xbf16>
    %cst_36 = arith.constant dense<0.000000e+00> : vector<4x256xf32>
    %102 = tpu.matmul %100, %101, %cst_36 {dimension_numbers = #tpu.dot_dimension_numbers<[1], [0], [0], [1], [0, 0, 1, 1], [], []>} : vector<4x4xbf16>, vector<4x256xbf16>, vector<4x256xf32> -> vector<4x256xf32>
    %103 = arith.addf %99, %102 : vector<4x256xf32>
    %c0_37 = arith.constant 0 : index
    %c32 = arith.constant 32 : index
    %104 = vector.load %arg2[%c0_37, %c32] : memref<4x36xbf16, #tpu.memory_space<vmem>>, vector<4x4xbf16>
    %105 = arith.truncf %70 : vector<4x256xf32> to vector<4x256xbf16>
    %cst_38 = arith.constant dense<0.000000e+00> : vector<4x256xf32>
    %106 = tpu.matmul %104, %105, %cst_38 {dimension_numbers = #tpu.dot_dimension_numbers<[1], [0], [0], [1], [0, 0, 1, 1], [], []>} : vector<4x4xbf16>, vector<4x256xbf16>, vector<4x256xf32> -> vector<4x256xf32>
    %107 = arith.addf %103, %106 : vector<4x256xf32>
    %c0_39 = arith.constant 0 : index
    %c0_40 = arith.constant 0 : index
    %108 = vector.load %arg3[%c0_39, %c0_40] : memref<4x1xf32, #tpu.memory_space<vmem>>, vector<4x1xf32>
    %109 = vector.broadcast %108 : vector<4x1xf32> to vector<4x256xf32>
    %110 = arith.addf %107, %109 : vector<4x256xf32>
    %cst_41 = arith.constant 0.000000e+00 : f32
    %111 = vector.broadcast %cst_41 : f32 to vector<4x256xf32>
    %112 = arith.maximumf %110, %111 : vector<4x256xf32>
    %cst_42 = arith.constant 0.000000e+00 : f32
    %113 = vector.broadcast %cst_42 : f32 to vector<4x17xf32>
    %114 = vector.extract_strided_slice %112 {offsets = [0, 0], sizes = [4, 239], strides = [1, 1]} : vector<4x256xf32> to vector<4x239xf32>
    %115 = tpu.concatenate %113, %114 in 1 : vector<4x17xf32>, vector<4x239xf32> -> vector<4x256xf32>
    %cst_43 = arith.constant 0.000000e+00 : f32
    %116 = vector.shape_cast %18 : vector<1x256xi1> to vector<1x256xi1>
    %117 = vector.broadcast %116 : vector<1x256xi1> to vector<4x256xi1>
    %118 = vector.broadcast %cst_43 : f32 to vector<4x256xf32>
    %119 = arith.select %117, %115, %118 : vector<4x256xi1>, vector<4x256xf32>
    %cst_44 = arith.constant 0.000000e+00 : f32
    %120 = vector.broadcast %cst_44 : f32 to vector<4x16xf32>
    %121 = vector.extract_strided_slice %112 {offsets = [0, 0], sizes = [4, 240], strides = [1, 1]} : vector<4x256xf32> to vector<4x240xf32>
    %122 = tpu.concatenate %120, %121 in 1 : vector<4x16xf32>, vector<4x240xf32> -> vector<4x256xf32>
    %cst_45 = arith.constant 0.000000e+00 : f32
    %123 = vector.broadcast %cst_45 : f32 to vector<4x15xf32>
    %124 = vector.extract_strided_slice %112 {offsets = [0, 0], sizes = [4, 241], strides = [1, 1]} : vector<4x256xf32> to vector<4x241xf32>
    %125 = tpu.concatenate %123, %124 in 1 : vector<4x15xf32>, vector<4x241xf32> -> vector<4x256xf32>
    %cst_46 = arith.constant 0.000000e+00 : f32
    %126 = vector.shape_cast %20 : vector<1x256xi1> to vector<1x256xi1>
    %127 = vector.broadcast %126 : vector<1x256xi1> to vector<4x256xi1>
    %128 = vector.broadcast %cst_46 : f32 to vector<4x256xf32>
    %129 = arith.select %127, %125, %128 : vector<4x256xi1>, vector<4x256xf32>
    %cst_47 = arith.constant 0.000000e+00 : f32
    %130 = vector.broadcast %cst_47 : f32 to vector<4x1xf32>
    %131 = vector.extract_strided_slice %112 {offsets = [0, 0], sizes = [4, 255], strides = [1, 1]} : vector<4x256xf32> to vector<4x255xf32>
    %132 = tpu.concatenate %130, %131 in 1 : vector<4x1xf32>, vector<4x255xf32> -> vector<4x256xf32>
    %cst_48 = arith.constant 0.000000e+00 : f32
    %133 = vector.shape_cast %18 : vector<1x256xi1> to vector<1x256xi1>
    %134 = vector.broadcast %133 : vector<1x256xi1> to vector<4x256xi1>
    %135 = vector.broadcast %cst_48 : f32 to vector<4x256xf32>
    %136 = arith.select %134, %132, %135 : vector<4x256xi1>, vector<4x256xf32>
    %cst_49 = arith.constant 0.000000e+00 : f32
    %137 = vector.broadcast %cst_49 : f32 to vector<4x1xf32>
    %138 = vector.extract_strided_slice %112 {offsets = [0, 1], sizes = [4, 255], strides = [1, 1]} : vector<4x256xf32> to vector<4x255xf32>
    %139 = tpu.concatenate %138, %137 in 1 : vector<4x255xf32>, vector<4x1xf32> -> vector<4x256xf32>
    %cst_50 = arith.constant 0.000000e+00 : f32
    %140 = vector.shape_cast %20 : vector<1x256xi1> to vector<1x256xi1>
    %141 = vector.broadcast %140 : vector<1x256xi1> to vector<4x256xi1>
    %142 = vector.broadcast %cst_50 : f32 to vector<4x256xf32>
    %143 = arith.select %141, %139, %142 : vector<4x256xi1>, vector<4x256xf32>
    %cst_51 = arith.constant 0.000000e+00 : f32
    %144 = vector.broadcast %cst_51 : f32 to vector<4x15xf32>
    %145 = vector.extract_strided_slice %112 {offsets = [0, 15], sizes = [4, 241], strides = [1, 1]} : vector<4x256xf32> to vector<4x241xf32>
    %146 = tpu.concatenate %145, %144 in 1 : vector<4x241xf32>, vector<4x15xf32> -> vector<4x256xf32>
    %cst_52 = arith.constant 0.000000e+00 : f32
    %147 = vector.shape_cast %18 : vector<1x256xi1> to vector<1x256xi1>
    %148 = vector.broadcast %147 : vector<1x256xi1> to vector<4x256xi1>
    %149 = vector.broadcast %cst_52 : f32 to vector<4x256xf32>
    %150 = arith.select %148, %146, %149 : vector<4x256xi1>, vector<4x256xf32>
    %cst_53 = arith.constant 0.000000e+00 : f32
    %151 = vector.broadcast %cst_53 : f32 to vector<4x16xf32>
    %152 = vector.extract_strided_slice %112 {offsets = [0, 16], sizes = [4, 240], strides = [1, 1]} : vector<4x256xf32> to vector<4x240xf32>
    %153 = tpu.concatenate %152, %151 in 1 : vector<4x240xf32>, vector<4x16xf32> -> vector<4x256xf32>
    %cst_54 = arith.constant 0.000000e+00 : f32
    %154 = vector.broadcast %cst_54 : f32 to vector<4x17xf32>
    %155 = vector.extract_strided_slice %112 {offsets = [0, 17], sizes = [4, 239], strides = [1, 1]} : vector<4x256xf32> to vector<4x239xf32>
    %156 = tpu.concatenate %155, %154 in 1 : vector<4x239xf32>, vector<4x17xf32> -> vector<4x256xf32>
    %cst_55 = arith.constant 0.000000e+00 : f32
    %157 = vector.shape_cast %20 : vector<1x256xi1> to vector<1x256xi1>
    %158 = vector.broadcast %157 : vector<1x256xi1> to vector<4x256xi1>
    %159 = vector.broadcast %cst_55 : f32 to vector<4x256xf32>
    %160 = arith.select %158, %156, %159 : vector<4x256xi1>, vector<4x256xf32>
    %cst_56 = arith.constant 0.000000e+00 : f32
    %161 = vector.broadcast %cst_56 : f32 to vector<4x256xf32>
    %c0_57 = arith.constant 0 : index
    %c0_58 = arith.constant 0 : index
    %162 = vector.load %arg4[%c0_57, %c0_58] : memref<4x36xbf16, #tpu.memory_space<vmem>>, vector<4x4xbf16>
    %163 = arith.truncf %119 : vector<4x256xf32> to vector<4x256xbf16>
    %cst_59 = arith.constant dense<0.000000e+00> : vector<4x256xf32>
    %164 = tpu.matmul %162, %163, %cst_59 {dimension_numbers = #tpu.dot_dimension_numbers<[1], [0], [0], [1], [0, 0, 1, 1], [], []>} : vector<4x4xbf16>, vector<4x256xbf16>, vector<4x256xf32> -> vector<4x256xf32>
    %165 = arith.addf %161, %164 : vector<4x256xf32>
    %c0_60 = arith.constant 0 : index
    %c4_61 = arith.constant 4 : index
    %166 = vector.load %arg4[%c0_60, %c4_61] : memref<4x36xbf16, #tpu.memory_space<vmem>>, vector<4x4xbf16>
    %167 = arith.truncf %122 : vector<4x256xf32> to vector<4x256xbf16>
    %cst_62 = arith.constant dense<0.000000e+00> : vector<4x256xf32>
    %168 = tpu.matmul %166, %167, %cst_62 {dimension_numbers = #tpu.dot_dimension_numbers<[1], [0], [0], [1], [0, 0, 1, 1], [], []>} : vector<4x4xbf16>, vector<4x256xbf16>, vector<4x256xf32> -> vector<4x256xf32>
    %169 = arith.addf %165, %168 : vector<4x256xf32>
    %c0_63 = arith.constant 0 : index
    %c8_64 = arith.constant 8 : index
    %170 = vector.load %arg4[%c0_63, %c8_64] : memref<4x36xbf16, #tpu.memory_space<vmem>>, vector<4x4xbf16>
    %171 = arith.truncf %129 : vector<4x256xf32> to vector<4x256xbf16>
    %cst_65 = arith.constant dense<0.000000e+00> : vector<4x256xf32>
    %172 = tpu.matmul %170, %171, %cst_65 {dimension_numbers = #tpu.dot_dimension_numbers<[1], [0], [0], [1], [0, 0, 1, 1], [], []>} : vector<4x4xbf16>, vector<4x256xbf16>, vector<4x256xf32> -> vector<4x256xf32>
    %173 = arith.addf %169, %172 : vector<4x256xf32>
    %c0_66 = arith.constant 0 : index
    %c12_67 = arith.constant 12 : index
    %174 = vector.load %arg4[%c0_66, %c12_67] : memref<4x36xbf16, #tpu.memory_space<vmem>>, vector<4x4xbf16>
    %175 = arith.truncf %136 : vector<4x256xf32> to vector<4x256xbf16>
    %cst_68 = arith.constant dense<0.000000e+00> : vector<4x256xf32>
    %176 = tpu.matmul %174, %175, %cst_68 {dimension_numbers = #tpu.dot_dimension_numbers<[1], [0], [0], [1], [0, 0, 1, 1], [], []>} : vector<4x4xbf16>, vector<4x256xbf16>, vector<4x256xf32> -> vector<4x256xf32>
    %177 = arith.addf %173, %176 : vector<4x256xf32>
    %c0_69 = arith.constant 0 : index
    %c16_70 = arith.constant 16 : index
    %178 = vector.load %arg4[%c0_69, %c16_70] : memref<4x36xbf16, #tpu.memory_space<vmem>>, vector<4x4xbf16>
    %179 = arith.truncf %112 : vector<4x256xf32> to vector<4x256xbf16>
    %cst_71 = arith.constant dense<0.000000e+00> : vector<4x256xf32>
    %180 = tpu.matmul %178, %179, %cst_71 {dimension_numbers = #tpu.dot_dimension_numbers<[1], [0], [0], [1], [0, 0, 1, 1], [], []>} : vector<4x4xbf16>, vector<4x256xbf16>, vector<4x256xf32> -> vector<4x256xf32>
    %181 = arith.addf %177, %180 : vector<4x256xf32>
    %c0_72 = arith.constant 0 : index
    %c20_73 = arith.constant 20 : index
    %182 = vector.load %arg4[%c0_72, %c20_73] : memref<4x36xbf16, #tpu.memory_space<vmem>>, vector<4x4xbf16>
    %183 = arith.truncf %143 : vector<4x256xf32> to vector<4x256xbf16>
    %cst_74 = arith.constant dense<0.000000e+00> : vector<4x256xf32>
    %184 = tpu.matmul %182, %183, %cst_74 {dimension_numbers = #tpu.dot_dimension_numbers<[1], [0], [0], [1], [0, 0, 1, 1], [], []>} : vector<4x4xbf16>, vector<4x256xbf16>, vector<4x256xf32> -> vector<4x256xf32>
    %185 = arith.addf %181, %184 : vector<4x256xf32>
    %c0_75 = arith.constant 0 : index
    %c24_76 = arith.constant 24 : index
    %186 = vector.load %arg4[%c0_75, %c24_76] : memref<4x36xbf16, #tpu.memory_space<vmem>>, vector<4x4xbf16>
    %187 = arith.truncf %150 : vector<4x256xf32> to vector<4x256xbf16>
    %cst_77 = arith.constant dense<0.000000e+00> : vector<4x256xf32>
    %188 = tpu.matmul %186, %187, %cst_77 {dimension_numbers = #tpu.dot_dimension_numbers<[1], [0], [0], [1], [0, 0, 1, 1], [], []>} : vector<4x4xbf16>, vector<4x256xbf16>, vector<4x256xf32> -> vector<4x256xf32>
    %189 = arith.addf %185, %188 : vector<4x256xf32>
    %c0_78 = arith.constant 0 : index
    %c28_79 = arith.constant 28 : index
    %190 = vector.load %arg4[%c0_78, %c28_79] : memref<4x36xbf16, #tpu.memory_space<vmem>>, vector<4x4xbf16>
    %191 = arith.truncf %153 : vector<4x256xf32> to vector<4x256xbf16>
    %cst_80 = arith.constant dense<0.000000e+00> : vector<4x256xf32>
    %192 = tpu.matmul %190, %191, %cst_80 {dimension_numbers = #tpu.dot_dimension_numbers<[1], [0], [0], [1], [0, 0, 1, 1], [], []>} : vector<4x4xbf16>, vector<4x256xbf16>, vector<4x256xf32> -> vector<4x256xf32>
    %193 = arith.addf %189, %192 : vector<4x256xf32>
    %c0_81 = arith.constant 0 : index
    %c32_82 = arith.constant 32 : index
    %194 = vector.load %arg4[%c0_81, %c32_82] : memref<4x36xbf16, #tpu.memory_space<vmem>>, vector<4x4xbf16>
    %195 = arith.truncf %160 : vector<4x256xf32> to vector<4x256xbf16>
    %cst_83 = arith.constant dense<0.000000e+00> : vector<4x256xf32>
    %196 = tpu.matmul %194, %195, %cst_83 {dimension_numbers = #tpu.dot_dimension_numbers<[1], [0], [0], [1], [0, 0, 1, 1], [], []>} : vector<4x4xbf16>, vector<4x256xbf16>, vector<4x256xf32> -> vector<4x256xf32>
    %197 = arith.addf %193, %196 : vector<4x256xf32>
    %c0_84 = arith.constant 0 : index
    %c0_85 = arith.constant 0 : index
    %198 = vector.load %arg5[%c0_84, %c0_85] : memref<4x1xf32, #tpu.memory_space<vmem>>, vector<4x1xf32>
    %199 = vector.broadcast %198 : vector<4x1xf32> to vector<4x256xf32>
    %200 = arith.addf %197, %199 : vector<4x256xf32>
    %201 = arith.addf %200, %22 : vector<4x256xf32>
    %cst_86 = arith.constant 0.000000e+00 : f32
    %202 = vector.broadcast %cst_86 : f32 to vector<4x256xf32>
    %203 = arith.maximumf %201, %202 : vector<4x256xf32>
    %c0_87 = arith.constant 0 : index
    %c0_88 = arith.constant 0 : index
    %c0_89 = arith.constant 0 : index
    %204 = vector.load %arg6[%c0_87, %c0_88, %c0_89] : memref<1x4x256xf32, #tpu.memory_space<vmem>>, vector<1x4x256xf32>
    %205 = vector.shape_cast %204 : vector<1x4x256xf32> to vector<4x256xf32>
    %206 = vector.shape_cast %203 : vector<4x256xf32> to vector<1x4x256xf32>
    tpu.vector_store %arg6[%c0_87, %c0_88, %c0_89], %206 {strides = array<i32>} : memref<1x4x256xf32, #tpu.memory_space<vmem>>, vector<1x4x256xf32>,
    return
  }
  func.func @transform_0(%arg0: i32) -> (i32, i32, i32) {
    %c0_i32 = arith.constant 0 : i32
    %c0_i32_0 = arith.constant 0 : i32
    %c0_i32_1 = arith.constant 0 : i32
    return %arg0, %c0_i32, %c0_i32_0 : i32, i32, i32
  }
  func.func @transform_1(%arg0: i32) -> (i32, i32) {
    %c0_i32 = arith.constant 0 : i32
    %c0_i32_0 = arith.constant 0 : i32
    %c0_i32_1 = arith.constant 0 : i32
    return %c0_i32, %c0_i32_0 : i32, i32
  }
  func.func @transform_2(%arg0: i32) -> (i32, i32) {
    %c0_i32 = arith.constant 0 : i32
    %c0_i32_0 = arith.constant 0 : i32
    %c0_i32_1 = arith.constant 0 : i32
    return %c0_i32, %c0_i32_0 : i32, i32
  }
  func.func @transform_3(%arg0: i32) -> (i32, i32) {
    %c0_i32 = arith.constant 0 : i32
    %c0_i32_0 = arith.constant 0 : i32
    %c0_i32_1 = arith.constant 0 : i32
    return %c0_i32, %c0_i32_0 : i32, i32
  }
  func.func @transform_4(%arg0: i32) -> (i32, i32) {
    %c0_i32 = arith.constant 0 : i32
    %c0_i32_0 = arith.constant 0 : i32
    %c0_i32_1 = arith.constant 0 : i32
    return %c0_i32, %c0_i32_0 : i32, i32
  }
  func.func @transform_5(%arg0: i32) -> (i32, i32, i32) {
    %c0_i32 = arith.constant 0 : i32
    %c0_i32_0 = arith.constant 0 : i32
    %c0_i32_1 = arith.constant 0 : i32
    return %arg0, %c0_i32, %c0_i32_0 : i32, i32, i32
  }
}

</mosaic_0001>

<llo_original>
// kernel: basic_block_forward.1
$region0: #{basic_block_forward.1}
  #allocation0 [shape = 'u32[]', space=smem, size = 0x4, offset = 0x4, fixed_abs, tag = 'smem constant byte address 0x4 - core index']
  #allocation1 [shape = 'u32[72,128]{1,0:T(1,128)}', space=vmem, size = 0x9000, scoped, tag = 'internal scratch']
  %s0 = inlined_call_operand.vmem [shape: f32[2,4,256], index: 0, kind: input, shape index: {}]
  %s1 = inlined_call_operand.vmem [shape: bf16[4,36], index: 1, kind: input, shape index: {}]
  %s2 = inlined_call_operand.vmem [shape: f32[4,1], index: 2, kind: input, shape index: {}]
  %s3 = inlined_call_operand.vmem [shape: bf16[4,36], index: 3, kind: input, shape index: {}]
  %s4 = inlined_call_operand.vmem [shape: f32[4,1], index: 4, kind: input, shape index: {}]
  %s5 = inlined_call_operand.vmem [shape: f32[2,4,256], index: 5, kind: output, shape index: {}]
  %s6 = sld [smem:[#allocation0]]
  $region53: #{basic_block_forward.1} parent=0
    _
  %s8 = ssub.s32 1, %s6
  %s9 = scalar_select 0, %s8, %s6
  loop: start=0, step=1, limit=4
  $region2: #{basic_block_forward.1} parent=0 // loop_pre_header
    _
  $region3: #{basic_block_forward.1} parent=0 // loop_header
    %s11 = sphi 0, %s15
    %p12 = scmp.ge.s32.totalorder %s11, 4
    %s21 = sphi 0, %s23
    %s24 = sphi 0, %s21
    %s25 = sphi 0, %s24
    %s41 = sphi 0, %s25
    %s45 = sphi 0, %s45
    %s47 = sphi 0, %s45
    %s48 = sphi 0, %s47
    %s62 = sphi 0, %s48
    %s66 = sphi 0, %s66
    %s68 = sphi 0, %s66
    %s69 = sphi 0, %s68
    %s83 = sphi 0, %s69
    %s87 = sphi 0, %s87
    %s89 = sphi 0, %s87
    %s90 = sphi 0, %s89
    %s104 = sphi 0, %s90
    %s108 = sphi 0, %s108
    %s110 = sphi 0, %s108
    %s111 = sphi 0, %s110
    %s125 = sphi 0, %s111
    %s131 = sphi 0, %s133
    %s134 = sphi 0, %s131
    %s135 = sphi 0, %s134
    %s151 = sphi 0, %s135
  $region4: #{basic_block_forward.1} parent=0 // loop_header_branch
    %14 = sbr.rel (%p12) target = $region8
  $region5: #{basic_block_forward.1} parent=0 // loop_body
    %s16 = ssub.s32 %s11, 1
    %s17 = ssub.s32 %s11, 2
    %s18 = sadd.s32 %s11, 1
    %s19 = ssub.s32 %s11, %s18
    %p20 = scmp.eq.s32.totalorder %s19, 0
    %s22 = sadd.s32 %s21, 1
    %s23 = scalar_select %p20, %s21, %s22
    %p26 = pneg %p20
    %p27 = scmp.eq.s32.totalorder %s11, 1
    %p28 = por %p26, %p27
    %p29 = scmp.ne.s32.totalorder %s21, %s24
    %p30 = scmp.eq.s32.totalorder %s11, 0
    %p31 = por %p29, %p30
    %p32 = scmp.ne.s32.totalorder %s21, %s24
    %p33 = scmp.eq.s32.totalorder %s16, 1
    %p34 = por %p32, %p33
    %p35 = scmp.ne.s32.totalorder %s24, %s25
    %p36 = scmp.eq.s32.totalorder %s16, 0
    %p37 = por %p35, %p36
    %p38 = scmp.ne.s32.totalorder %s24, %s25
    %p39 = scmp.eq.s32.totalorder %s17, 1
    %p40 = por %p38, %p39
    %p42 = scmp.ne.s32.totalorder %s25, %s41
    %p43 = scmp.eq.s32.totalorder %s17, 0
    %p44 = por %p42, %p43
    %s46 = sadd.s32 %s45, 1
    %p49 = scmp.eq.s32.totalorder %s11, 1
    %p50 = scmp.ne.s32.totalorder %s45, %s47
    %p51 = scmp.eq.s32.totalorder %s11, 0
    %p52 = por %p50, %p51
    %p53 = scmp.ne.s32.totalorder %s45, %s47
    %p54 = scmp.eq.s32.totalorder %s16, 1
    %p55 = por %p53, %p54
    %p56 = scmp.ne.s32.totalorder %s47, %s48
    %p57 = scmp.eq.s32.totalorder %s16, 0
    %p58 = por %p56, %p57
    %p59 = scmp.ne.s32.totalorder %s47, %s48
    %p60 = scmp.eq.s32.totalorder %s17, 1
    %p61 = por %p59, %p60
    %p63 = scmp.ne.s32.totalorder %s48, %s62
    %p64 = scmp.eq.s32.totalorder %s17, 0
    %p65 = por %p63, %p64
    %s67 = sadd.s32 %s66, 1
    %p70 = scmp.eq.s32.totalorder %s11, 1
    %p71 = scmp.ne.s32.totalorder %s66, %s68
    %p72 = scmp.eq.s32.totalorder %s11, 0
    %p73 = por %p71, %p72
    %p74 = scmp.ne.s32.totalorder %s66, %s68
    %p75 = scmp.eq.s32.totalorder %s16, 1
    %p76 = por %p74, %p75
    %p77 = scmp.ne.s32.totalorder %s68, %s69
    %p78 = scmp.eq.s32.totalorder %s16, 0
    %p79 = por %p77, %p78
    %p80 = scmp.ne.s32.totalorder %s68, %s69
    %p81 = scmp.eq.s32.totalorder %s17, 1
    %p82 = por %p80, %p81
    %p84 = scmp.ne.s32.totalorder %s69, %s83
    %p85 = scmp.eq.s32.totalorder %s17, 0
    %p86 = por %p84, %p85
    %s88 = sadd.s32 %s87, 1
    %p91 = scmp.eq.s32.totalorder %s11, 1
    %p92 = scmp.ne.s32.totalorder %s87, %s89
    %p93 = scmp.eq.s32.totalorder %s11, 0
    %p94 = por %p92, %p93
    %p95 = scmp.ne.s32.totalorder %s87, %s89
    %p96 = scmp.eq.s32.totalorder %s16, 1
    %p97 = por %p95, %p96
    %p98 = scmp.ne.s32.totalorder %s89, %s90
    %p99 = scmp.eq.s32.totalorder %s16, 0
    %p100 = por %p98, %p99
    %p101 = scmp.ne.s32.totalorder %s89, %s90
    %p102 = scmp.eq.s32.totalorder %s17, 1
    %p103 = por %p101, %p102
    %p105 = scmp.ne.s32.totalorder %s90, %s104
    %p106 = scmp.eq.s32.totalorder %s17, 0
    %p107 = por %p105, %p106
    %s109 = sadd.s32 %s108, 1
    %p112 = scmp.eq.s32.totalorder %s11, 1
    %p113 = scmp.ne.s32.totalorder %s108, %s110
    %p114 = scmp.eq.s32.totalorder %s11, 0
    %p115 = por %p113, %p114
    %p116 = scmp.ne.s32.totalorder %s108, %s110
    %p117 = scmp.eq.s32.totalorder %s16, 1
    %p118 = por %p116, %p117
    %p119 = scmp.ne.s32.totalorder %s110, %s111
    %p120 = scmp.eq.s32.totalorder %s16, 0
    %p121 = por %p119, %p120
    %p122 = scmp.ne.s32.totalorder %s110, %s111
    %p123 = scmp.eq.s32.totalorder %s17, 1
    %p124 = por %p122, %p123
    %p126 = scmp.ne.s32.totalorder %s111, %s125
    %p127 = scmp.eq.s32.totalorder %s17, 0
    %p128 = por %p126, %p127
    %s129 = ssub.s32 %s11, %s18
    %p130 = scmp.eq.s32.totalorder %s129, 0
    %s132 = sadd.s32 %s131, 1
    %s133 = scalar_select %p130, %s131, %s132
    %p136 = pneg %p130
    %p137 = scmp.eq.s32.totalorder %s11, 1
    %p138 = por %p136, %p137
    %p139 = scmp.ne.s32.totalorder %s131, %s134
    %p140 = scmp.eq.s32.totalorder %s11, 0
    %p141 = por %p139, %p140
    %p142 = scmp.ne.s32.totalorder %s131, %s134
    %p143 = scmp.eq.s32.totalorder %s16, 1
    %p144 = por %p142, %p143
    %p145 = scmp.ne.s32.totalorder %s134, %s135
    %p146 = scmp.eq.s32.totalorder %s16, 0
    %p147 = por %p145, %p146
    %p148 = scmp.ne.s32.totalorder %s134, %s135
    %p149 = scmp.eq.s32.totalorder %s17, 1
    %p150 = por %p148, %p149
    %p152 = scmp.ne.s32.totalorder %s135, %s151
    %p153 = scmp.eq.s32.totalorder %s17, 0
    %p154 = por %p152, %p153
    %p155 = scmp.le.s32.totalorder 1, %s11
    %p156 = scmp.lt.s32.totalorder %s11, 3
    %p157 = pnand %p155, %p156
    %p158 = pneg %p157
    // Predicated region
    $region9: #{basic_block_forward.1} parent=5 // pred_check
      _
    $region10: #{basic_block_forward.1} parent=5 // pred_check_branch
      %160 = sbr.rel (%p157) target = $region12
    $region11: #{basic_block_forward.1} parent=5 // pred_region
      %s161 = ssub.s32 %s11, 1
      // Predicated region
      $region13: #{basic_block_forward.1} parent=11 // pred_check
        %p162 = pneg %p58
      $region14: #{basic_block_forward.1} parent=11 // pred_check_branch
        %164 = sbr.rel (%p162) target = $region16
      $region15: #{basic_block_forward.1} parent=11 // pred_region
        _
      $region16: #{basic_block_forward.1} parent=11 // pred_fallthru
        _
      // Predicated region
      $region17: #{basic_block_forward.1} parent=11 // pred_check
        %p165 = pneg %p79
      $region18: #{basic_block_forward.1} parent=11 // pred_check_branch
        %167 = sbr.rel (%p165) target = $region20
      $region19: #{basic_block_forward.1} parent=11 // pred_region
        _
      $region20: #{basic_block_forward.1} parent=11 // pred_fallthru
        _
      // Predicated region
      $region21: #{basic_block_forward.1} parent=11 // pred_check
        %p168 = pneg %p100
      $region22: #{basic_block_forward.1} parent=11 // pred_check_branch
        %170 = sbr.rel (%p168) target = $region24
      $region23: #{basic_block_forward.1} parent=11 // pred_region
        _
      $region24: #{basic_block_forward.1} parent=11 // pred_fallthru
        _
      // Predicated region
      $region25: #{basic_block_forward.1} parent=11 // pred_check
        %p171 = pneg %p121
      $region26: #{basic_block_forward.1} parent=11 // pred_check_branch
        %173 = sbr.rel (%p171) target = $region28
      $region27: #{basic_block_forward.1} parent=11 // pred_region
        _
      $region28: #{basic_block_forward.1} parent=11 // pred_fallthru
        _
    $region12: #{basic_block_forward.1} parent=5 // pred_fallthru
      _
    %p174 = scmp.lt.s32.totalorder %s11, 2
    // Predicated region
    $region29: #{basic_block_forward.1} parent=5 // pred_check
      %p175 = pneg %p174
    $region30: #{basic_block_forward.1} parent=5 // pred_check_branch
      %177 = sbr.rel (%p175) target = $region32
    $region31: #{basic_block_forward.1} parent=5 // pred_region
      // Predicated region
      $region33: #{basic_block_forward.1} parent=31 // pred_check
        %p178 = pneg %p31
      $region34: #{basic_block_forward.1} parent=31 // pred_check_branch
        %180 = sbr.rel (%p178) target = $region36
      $region35: #{basic_block_forward.1} parent=31 // pred_region
        %p181 = scmp.lt.s32.totalorder %s11, 1
        %s182 = scalar_select %p181, %s11, 1
        %s183 = smul.addr %s182, 2
        %s184 = smul.addr %s183, 4
        %s185 = scalar_lea.vmem %s0, %s184
      $region36: #{basic_block_forward.1} parent=31 // pred_fallthru
        _
    $region32: #{basic_block_forward.1} parent=5 // pred_fallthru
      _
    %p186 = scmp.le.s32.totalorder 1, %s11
    %p187 = scmp.lt.s32.totalorder %s11, 3
    %p188 = pnand %p186, %p187
    %p189 = pneg %p188
    // Predicated region
    $region37: #{basic_block_forward.1} parent=5 // pred_check
      _
    $region38: #{basic_block_forward.1} parent=5 // pred_check_branch
      %191 = sbr.rel (%p188) target = $region40
    $region39: #{basic_block_forward.1} parent=5 // pred_region
      %s192 = ssub.s32 %s11, 1
      %p193 = scmp.lt.s32.totalorder %s16, 1
      %s194 = scalar_select %p193, %s16, 1
      %s195 = smul.addr %s194, 2
      %s196 = smul.addr %s195, 4
      %s197 = scalar_lea.vmem %s0, %s196
      %p198 = pneg %p37
      %p199 = pneg %p34
      %p200 = pneg %p58
      %p201 = pneg %p55
      %p202 = pneg %p79
      %p203 = pneg %p76
      %p204 = pneg %p100
      %p205 = pneg %p97
      %p206 = pneg %p121
      %p207 = pneg %p118
      %p208 = pneg %p147
      %p209 = pneg %p144
      %p210 = scmp.lt.s32.totalorder %s16, 1
      %s211 = scalar_select %p210, %s16, 1
      %s212 = smul.addr %s211, 2
      %s213 = smul.addr %s212, 4
      %s214 = scalar_lea.vmem %s5, %s213
      %p215 = scmp.lt.s32.totalorder %s16, 1
      %s216 = scalar_select %p215, %s16, 1
      %s217 = smul.addr %s216, 2
      %s218 = smul.addr %s217, 4
      %s219 = scalar_lea.vmem %s0, %s218
      %p220 = scmp.lt.s32.totalorder %s16, 1
      %s221 = scalar_select %p220, %s16, 1
      %s222 = smul.addr %s221, 2
      %s223 = smul.addr %s222, 4
      %s224 = scalar_lea.vmem %s5, %s223
      %v226 = vlaneseq
      %v227 = vand.u32 %v226, 127
      %v228 = vadd.s32 %v227, 128
      %vm229 = vcmp.lt.s32.totalorder %v227, 0
      %v230 = vsub.s32 0, %v227
      %v231 = vsel %vm229, %v230, %v227
      %v232 = vshrl.u32 %v231, 4
      %v233 = vand.u32 %v231, 15
      %v234 = vsub.s32 0, %v233
      %v235 = vsel %vm229, %v234, %v233
      %vm236 = vcmp.lt.s32.totalorder %v228, 0
      %v237 = vsub.s32 0, %v228
      %v238 = vsel %vm236, %v237, %v228
      %v239 = vshrl.u32 %v238, 4
      %v240 = vand.u32 %v238, 15
      %v241 = vsub.s32 0, %v240
      %v242 = vsel %vm236, %v241, %v240
      %vm243 = vcmp.ne.s32.totalorder %v235, 0
      %vm244 = vcmp.ne.s32.totalorder %v242, 0
      %vm245 = vcmp.lt.s32.totalorder %v235, 0
      %vm246 = vcmp.lt.s32.totalorder %v242, 0
      %vm247 = vmand %vm245, %vm243
      %vm248 = vmand %vm246, %vm244
      %v249 = vadd.s32 %v235, 16
      %v250 = vadd.s32 %v242, 16
      %v251 = vsel %vm247, %v249, %v235
      %v252 = vsel %vm248, %v250, %v242
      %vm253 = vcmp.ge.s32.totalorder %v251, 1
      %vm254 = vcmp.ge.s32.totalorder %v252, 1
      %vm255 = vcmp.le.s32.totalorder %v251, 14
      %vm256 = vcmp.le.s32.totalorder %v252, 14
      %v257 = vld [vmem:[%s219] sm:$0xff]
      %259 = vst [vmem:[#allocation1] ss:$2 sm:$0xff] %v257
      %v260 = vld.sshfl [vmem:[#allocation1] sm:$0xff pattern:$0x75316420]
      %v261 = vld.sshfl [vmem:[#allocation1 + $0x8] sm:$0xff pattern:$0x75316420]
      %262 = vrot.lane.b32.xlu0 %v260, 17
      %v263 = vpop.permute.xlu0 %262
      %264 = vrot.lane.b32.xlu0 %v261, 17
      %v265 = vpop.permute.xlu0 %264
      %vm266 = vcmask 138240
      %v267 = vsel %vm266, %v263, %v265
      %v270 = vsel %vm266, 0.0, %v263
      %v271 = vsel %vm253, 1, 0
      %v272 = vsel %vm254, 1, 0
      %vm273 = vcmp.eq.s32.totalorder %v271, 1
      %vm274 = vcmp.eq.s32.totalorder %v272, 1
      %v275 = vsel %vm273, %v270, 0.0
      %v276 = vsel %vm274, %v267, 0.0
      %277 = vst [vmem:[#allocation1] ss:$2 sm:$0xff] %v257
      %v278 = vld.sshfl [vmem:[#allocation1] sm:$0xff pattern:$0x75316420]
      %v279 = vld.sshfl [vmem:[#allocation1 + $0x8] sm:$0xff pattern:$0x75316420]
      %280 = vrot.lane.b32.xlu0 %v278, 16
      %v281 = vpop.permute.xlu0 %280
      %282 = vrot.lane.b32.xlu0 %v279, 16
      %v283 = vpop.permute.xlu0 %282
      %vm284 = vcmask 130048
      %v285 = vsel %vm284, %v281, %v283
      %v287 = vsel %vm284, 0.0, %v281
      %288 = vst [vmem:[#allocation1] ss:$2 sm:$0xff] %v257
      %v289 = vld.sshfl [vmem:[#allocation1] sm:$0xff pattern:$0x75316420]
      %v290 = vld.sshfl [vmem:[#allocation1 + $0x8] sm:$0xff pattern:$0x75316420]
      %291 = vrot.lane.b32.xlu0 %v289, 15
      %v292 = vpop.permute.xlu0 %291
      %293 = vrot.lane.b32.xlu0 %v290, 15
      %v294 = vpop.permute.xlu0 %293
      %vm295 = vcmask 121856
      %v296 = vsel %vm295, %v292, %v294
      %v299 = vsel %vm295, 0.0, %v292
      %v300 = vsel %vm255, 1, 0
      %v301 = vsel %vm256, 1, 0
      %vm302 = vcmp.eq.s32.totalorder %v300, 1
      %vm303 = vcmp.eq.s32.totalorder %v301, 1
      %v304 = vsel %vm302, %v299, 0.0
      %v305 = vsel %vm303, %v296, 0.0
      %306 = vst [vmem:[#allocation1] ss:$2 sm:$0xff] %v257
      %v307 = vld.sshfl [vmem:[#allocation1] sm:$0xff pattern:$0x75316420]
      %v308 = vld.sshfl [vmem:[#allocation1 + $0x8] sm:$0xff pattern:$0x75316420]
      %309 = vrot.lane.b32.xlu0 %v307, 1
      %v310 = vpop.permute.xlu0 %309
      %311 = vrot.lane.b32.xlu0 %v308, 1
      %v312 = vpop.permute.xlu0 %311
      %vm313 = vcmask 7168
      %v314 = vsel %vm313, %v310, %v312
      %v317 = vsel %vm313, 0.0, %v310
      %v318 = vsel %vm273, %v317, 0.0
      %v319 = vsel %vm274, %v314, 0.0
      %320 = vst [vmem:[#allocation1] ss:$2 sm:$0xff] %v257
      %v321 = vld.sshfl [vmem:[#allocation1] sm:$0xff pattern:$0x75316420]
      %v322 = vld.sshfl [vmem:[#allocation1 + $0x8] sm:$0xff pattern:$0x75316420]
      %323 = vrot.lane.b32.xlu0 %v321, 127
      %v324 = vpop.permute.xlu0 %323
      %325 = vrot.lane.b32.xlu0 %v322, 127
      %v326 = vpop.permute.xlu0 %325
      %vm327 = vcmask 1039360
      %v328 = vsel %vm327, %v324, %v326
      %v331 = vsel %vm327, %v326, 0.0
      %v332 = vsel %vm302, %v328, 0.0
      %v333 = vsel %vm303, %v331, 0.0
      %334 = vst [vmem:[#allocation1] ss:$2 sm:$0xff] %v257
      %v335 = vld.sshfl [vmem:[#allocation1] sm:$0xff pattern:$0x75316420]
      %v336 = vld.sshfl [vmem:[#allocation1 + $0x8] sm:$0xff pattern:$0x75316420]
      %337 = vrot.lane.b32.xlu0 %v335, 113
      %v338 = vpop.permute.xlu0 %337
      %339 = vrot.lane.b32.xlu0 %v336, 113
      %v340 = vpop.permute.xlu0 %339
      %vm341 = vcmask 924672
      %v342 = vsel %vm341, %v338, %v340
      %v345 = vsel %vm341, %v340, 0.0
      %v346 = vsel %vm273, %v342, 0.0
      %v347 = vsel %vm274, %v345, 0.0
      %348 = vst [vmem:[#allocation1] ss:$2 sm:$0xff] %v257
      %v349 = vld.sshfl [vmem:[#allocation1] sm:$0xff pattern:$0x75316420]
      %v350 = vld.sshfl [vmem:[#allocation1 + $0x8] sm:$0xff pattern:$0x75316420]
      %351 = vrot.lane.b32.xlu0 %v349, 112
      %v352 = vpop.permute.xlu0 %351
      %353 = vrot.lane.b32.xlu0 %v350, 112
      %v354 = vpop.permute.xlu0 %353
      %vm355 = vcmask 916480
      %v356 = vsel %vm355, %v352, %v354
      %v358 = vsel %vm355, %v354, 0.0
      %359 = vst [vmem:[#allocation1] ss:$2 sm:$0xff] %v257
      %v360 = vld.sshfl [vmem:[#allocation1] sm:$0xff pattern:$0x75316420]
      %v361 = vld.sshfl [vmem:[#allocation1 + $0x8] sm:$0xff pattern:$0x75316420]
      %362 = vrot.lane.b32.xlu0 %v360, 111
      %v363 = vpop.permute.xlu0 %362
      %364 = vrot.lane.b32.xlu0 %v361, 111
      %v365 = vpop.permute.xlu0 %364
      %vm366 = vcmask 908288
      %v367 = vsel %vm366, %v363, %v365
      %v370 = vsel %vm366, %v365, 0.0
      %v371 = vsel %vm302, %v367, 0.0
      %v372 = vsel %vm303, %v370, 0.0
      %v374 = vrot.slane %v287, 4
      %v375 = vrot.slane %v285, 4
      %v380 = vrot.slane %v318, 4
      %v381 = vrot.slane %v319, 4
      %384 = vst [vmem:[#allocation1] ss:$2 sm:$0xff] %v257
      %v385 = vld.sshfl [vmem:[#allocation1] sm:$0xff pattern:$0x75316420]
      %v386 = vld.sshfl [vmem:[#allocation1 + $0x8] sm:$0xff pattern:$0x75316420]
      %v391 = vrot.slane %v332, 4
      %v392 = vrot.slane %v333, 4
      %v396 = vrot.slane %v356, 4
      %v397 = vrot.slane %v358, 4
      %vm400 = vcmask 1043456
      %v401 = vsel %vm400, %v275, %v374
      %v402 = vsel %vm400, %v276, %v375
      %v403 = vsel %vm400, %v304, %v380
      %v404 = vsel %vm400, %v305, %v381
      %v405 = vsel %vm400, %v385, %v391
      %v406 = vsel %vm400, %v386, %v392
      %v407 = vsel %vm400, %v346, %v396
      %v408 = vsel %vm400, %v347, %v397
      %v409 = vpack.c.bf16 %v403, %v401
      %v410 = vpack.c.bf16 %v404, %v402
      %v411 = vpack.c.bf16 %v407, %v405
      %v412 = vpack.c.bf16 %v408, %v406
      %v413 = vpack.c.bf16 %v371, %v371
      %v414 = vpack.c.bf16 %v372, %v372
      %v415 = vld [vmem:[%s1] sm:$0x3]
      %v416 = vld [vmem:[%s2] sm:$0xf]
      %418 = vset.pattern.permute.xlu0 0
      %419 = vperm.xlu0 %418, %v416
      %v420 = vpop.permute.xlu0 %419
      %vm422 = vcmask 293888
      %v424 = vsel %vm422, %v415, 0
      %vm426 = vcmask 1041408
      %v428 = vsel %vm426, %v413, 0
      %v431 = vsel %vm426, %v414, 0
      %433 = vmatpush.bf16.msra.mxu0 0
      %434 = vmatpush.bf16.msra.mxu0 0
      %435 = vmatpush.bf16.msra.mxu0 0
      %436 = vmatpush.bf16.msra.mxu0 0
      %437 = vmatpush.bf16.msra.mxu0 0
      %438 = vmatpush.bf16.msra.mxu0 %v428
      %439 = vmatpush.bf16.msra.mxu0 %v411
      %440 = vmatpush.bf16.msra.mxu0 %v409
      %441 = vmatmul.bf16.gmra.mxu0 %v424
      %v442 = vpop.f32.mrf.mxu0
      %v443 = vadd.f32 %v420, %v442
      %v444 = vpop.f32.mrf.mxu0
      %445 = vdwg.mxu0
      %446 = vmatpush.bf16.msra.mxu0 0
      %447 = vmatpush.bf16.msra.mxu0 0
      %448 = vmatpush.bf16.msra.mxu0 0
      %449 = vmatpush.bf16.msra.mxu0 0
      %450 = vmatpush.bf16.msra.mxu0 0
      %451 = vmatpush.bf16.msra.mxu0 %v431
      %452 = vmatpush.bf16.msra.mxu0 %v412
      %453 = vmatpush.bf16.msra.mxu0 %v410
      %454 = vmatmul.bf16.gmra.mxu0 %v424
      %v455 = vpop.f32.mrf.mxu0
      %v456 = vadd.f32 %v420, %v455
      %v457 = vpop.f32.mrf.mxu0
      %458 = vdwg.mxu0
      %v459 = vmax.f32 %v443, 0.0
      %v460 = vmax.f32 %v456, 0.0
      %463 = vrot.lane.b32.xlu0 %v459, 17
      %v464 = vpop.permute.xlu0 %463
      %465 = vrot.lane.b32.xlu0 %v460, 17
      %v466 = vpop.permute.xlu0 %465
      %v467 = vsel %vm266, %v464, %v466
      %v470 = vsel %vm266, 0.0, %v464
      %v471 = vsel %vm273, %v470, 0.0
      %v472 = vsel %vm274, %v467, 0.0
      %473 = vrot.lane.b32.xlu0 %v459, 16
      %v474 = vpop.permute.xlu0 %473
      %475 = vrot.lane.b32.xlu0 %v460, 16
      %v476 = vpop.permute.xlu0 %475
      %v477 = vsel %vm284, %v474, %v476
      %v479 = vsel %vm284, 0.0, %v474
      %480 = vrot.lane.b32.xlu0 %v459, 15
      %v481 = vpop.permute.xlu0 %480
      %482 = vrot.lane.b32.xlu0 %v460, 15
      %v483 = vpop.permute.xlu0 %482
      %v484 = vsel %vm295, %v481, %v483
      %v487 = vsel %vm295, 0.0, %v481
      %v488 = vsel %vm302, %v487, 0.0
      %v489 = vsel %vm303, %v484, 0.0
      %490 = vrot.lane.b32.xlu0 %v459, 1
      %v491 = vpop.permute.xlu0 %490
      %492 = vrot.lane.b32.xlu0 %v460, 1
      %v493 = vpop.permute.xlu0 %492
      %v494 = vsel %vm313, %v491, %v493
      %v497 = vsel %vm313, 0.0, %v491
      %v498 = vsel %vm273, %v497, 0.0
      %v499 = vsel %vm274, %v494, 0.0
      %500 = vrot.lane.b32.xlu0 %v459, 127
      %v501 = vpop.permute.xlu0 %500
      %502 = vrot.lane.b32.xlu0 %v460, 127
      %v503 = vpop.permute.xlu0 %502
      %v504 = vsel %vm327, %v501, %v503
      %v507 = vsel %vm327, %v503, 0.0
      %v508 = vsel %vm302, %v504, 0.0
      %v509 = vsel %vm303, %v507, 0.0
      %510 = vrot.lane.b32.xlu0 %v459, 113
      %v511 = vpop.permute.xlu0 %510
      %512 = vrot.lane.b32.xlu0 %v460, 113
      %v513 = vpop.permute.xlu0 %512
      %v514 = vsel %vm341, %v511, %v513
      %v517 = vsel %vm341, %v513, 0.0
      %v518 = vsel %vm273, %v514, 0.0
      %v519 = vsel %vm274, %v517, 0.0
      %520 = vrot.lane.b32.xlu0 %v459, 112
      %v521 = vpop.permute.xlu0 %520
      %522 = vrot.lane.b32.xlu0 %v460, 112
      %v523 = vpop.permute.xlu0 %522
      %v524 = vsel %vm355, %v521, %v523
      %v526 = vsel %vm355, %v523, 0.0
      %527 = vrot.lane.b32.xlu0 %v459, 111
      %v528 = vpop.permute.xlu0 %527
      %529 = vrot.lane.b32.xlu0 %v460, 111
      %v530 = vpop.permute.xlu0 %529
      %v531 = vsel %vm366, %v528, %v530
      %v534 = vsel %vm366, %v530, 0.0
      %v535 = vsel %vm302, %v531, 0.0
      %v536 = vsel %vm303, %v534, 0.0
      %v538 = vrot.slane %v479, 4
      %v539 = vrot.slane %v477, 4
      %v544 = vrot.slane %v498, 4
      %v545 = vrot.slane %v499, 4
      %v550 = vrot.slane %v508, 4
      %v551 = vrot.slane %v509, 4
      %v555 = vrot.slane %v524, 4
      %v556 = vrot.slane %v526, 4
      %v559 = vsel %vm400, %v471, %v538
      %v560 = vsel %vm400, %v472, %v539
      %v561 = vsel %vm400, %v488, %v544
      %v562 = vsel %vm400, %v489, %v545
      %v563 = vsel %vm400, %v459, %v550
      %v564 = vsel %vm400, %v460, %v551
      %v565 = vsel %vm400, %v518, %v555
      %v566 = vsel %vm400, %v519, %v556
      %v567 = vpack.c.bf16 %v561, %v559
      %v568 = vpack.c.bf16 %v562, %v560
      %v569 = vpack.c.bf16 %v565, %v563
      %v570 = vpack.c.bf16 %v566, %v564
      %v571 = vpack.c.bf16 %v535, %v535
      %v572 = vpack.c.bf16 %v536, %v536
      %v573 = vld [vmem:[%s3] sm:$0x3]
      %v574 = vld [vmem:[%s4] sm:$0xf]
      %576 = vset.pattern.permute.xlu0 0
      %577 = vperm.xlu0 %576, %v574
      %v578 = vpop.permute.xlu0 %577
      %v581 = vsel %vm422, %v573, 0
      %v584 = vsel %vm426, %v571, 0
      %v587 = vsel %vm426, %v572, 0
      %589 = vmatpush.bf16.msra.mxu0 0
      %590 = vmatpush.bf16.msra.mxu0 0
      %591 = vmatpush.bf16.msra.mxu0 0
      %592 = vmatpush.bf16.msra.mxu0 0
      %593 = vmatpush.bf16.msra.mxu0 0
      %594 = vmatpush.bf16.msra.mxu0 %v584
      %595 = vmatpush.bf16.msra.mxu0 %v569
      %596 = vmatpush.bf16.msra.mxu0 %v567
      %597 = vmatmul.bf16.gmra.mxu0 %v581
      %v598 = vpop.f32.mrf.mxu0
      %v599 = vadd.f32 %v578, %v598
      %v600 = vpop.f32.mrf.mxu0
      %601 = vdwg.mxu0
      %602 = vmatpush.bf16.msra.mxu0 0
      %603 = vmatpush.bf16.msra.mxu0 0
      %604 = vmatpush.bf16.msra.mxu0 0
      %605 = vmatpush.bf16.msra.mxu0 0
      %606 = vmatpush.bf16.msra.mxu0 0
      %607 = vmatpush.bf16.msra.mxu0 %v587
      %608 = vmatpush.bf16.msra.mxu0 %v570
      %609 = vmatpush.bf16.msra.mxu0 %v568
      %610 = vmatmul.bf16.gmra.mxu0 %v581
      %v611 = vpop.f32.mrf.mxu0
      %v612 = vadd.f32 %v578, %v611
      %v613 = vpop.f32.mrf.mxu0
      %614 = vdwg.mxu0
      %615 = vst [vmem:[#allocation1] ss:$2 sm:$0xff] %v257
      %v616 = vld.sshfl [vmem:[#allocation1] sm:$0xff pattern:$0x75316420]
      %v617 = vld.sshfl [vmem:[#allocation1 + $0x8] sm:$0xff pattern:$0x75316420]
      %v620 = vadd.f32 %v599, %v616
      %v621 = vadd.f32 %v612, %v617
      %v622 = vmax.f32 %v620, 0.0
      %v623 = vmax.f32 %v621, 0.0
      %v626 = vrot.slane %v623, 4
      %v627 = vsel %vm400, %v622, %v626
      %629 = vst [vmem:[%s224] sm:$0xff] %v627
      %p630 = scmp.lt.s32.totalorder %s16, 1
      %s631 = scalar_select %p630, %s16, 1
      %s632 = smul.addr %s631, 2
      %s633 = smul.addr %s632, 4
      %s634 = scalar_lea.vmem %s5, %s633
      // Predicated region
      $region41: #{basic_block_forward.1} parent=39 // pred_check
        %p635 = pneg %p144
      $region42: #{basic_block_forward.1} parent=39 // pred_check_branch
        %637 = sbr.rel (%p635) target = $region44
      $region43: #{basic_block_forward.1} parent=39 // pred_region
        _
      $region44: #{basic_block_forward.1} parent=39 // pred_fallthru
        _
    $region40: #{basic_block_forward.1} parent=5 // pred_fallthru
      _
    %p638 = scmp.le.s32.totalorder 2, %s11
    // Predicated region
    $region45: #{basic_block_forward.1} parent=5 // pred_check
      %p639 = pneg %p638
    $region46: #{basic_block_forward.1} parent=5 // pred_check_branch
      %641 = sbr.rel (%p639) target = $region48
    $region47: #{basic_block_forward.1} parent=5 // pred_region
      %s642 = ssub.s32 %s11, 2
      // Predicated region
      $region49: #{basic_block_forward.1} parent=47 // pred_check
        %p643 = pneg %p150
      $region50: #{basic_block_forward.1} parent=47 // pred_check_branch
        %645 = sbr.rel (%p643) target = $region52
      $region51: #{basic_block_forward.1} parent=47 // pred_region
        %p646 = scmp.lt.s32.totalorder %s17, 1
        %s647 = scalar_select %p646, %s17, 1
        %s648 = smul.addr %s647, 2
        %s649 = smul.addr %s648, 4
        %s650 = scalar_lea.vmem %s5, %s649
      $region52: #{basic_block_forward.1} parent=47 // pred_fallthru
        _
    $region48: #{basic_block_forward.1} parent=5 // pred_fallthru
      _
  $region6: #{basic_block_forward.1} parent=0 // loop_footer
    %s15 = sadd.s32 1, %s11
  $region7: #{basic_block_forward.1} parent=0 // loop_footer_branch
    %10 = sbr.rel target = $region3
  $region8: #{basic_block_forward.1} parent=0 // loop_exit
    _

// kernel: basic_block_forward.1
$region0: #{basic_block_forward.1}
  #allocation0 [shape = 'u32[]', space=smem, size = 0x4, offset = 0x4, fixed_abs, tag = 'smem constant byte address 0x4 - core index']
  #allocation1 [shape = 'u32[72,128]{1,0:T(1,128)}', space=vmem, size = 0x9000, scoped, tag = 'internal scratch']
  %s0 = inlined_call_operand.vmem [shape: f32[2,4,256], index: 0, kind: input, shape index: {}]
  %s1 = inlined_call_operand.vmem [shape: bf16[4,36], index: 1, kind: input, shape index: {}]
  %s2 = inlined_call_operand.vmem [shape: f32[4,1], index: 2, kind: input, shape index: {}]
  %s3 = inlined_call_operand.vmem [shape: bf16[4,36], index: 3, kind: input, shape index: {}]
  %s4 = inlined_call_operand.vmem [shape: f32[4,1], index: 4, kind: input, shape index: {}]
  %s5 = inlined_call_operand.vmem [shape: f32[2,4,256], index: 5, kind: output, shape index: {}]
  %s6 = sld [smem:[#allocation0]]
  $region53: #{basic_block_forward.1} parent=0
    _
  %s8 = ssub.s32 1, %s6
  %s9 = scalar_select 0, %s8, %s6
  loop: start=0, step=1, limit=4
  $region2: #{basic_block_forward.1} parent=0 // loop_pre_header
    _
  $region3: #{basic_block_forward.1} parent=0 // loop_header
    %s11 = sphi 0, %s15
    %p12 = scmp.ge.s32.totalorder %s11, 4
    %s21 = sphi 0, %s23
    %s24 = sphi 0, %s21
    %s25 = sphi 0, %s24
    %s41 = sphi 0, %s25
    %s45 = sphi 0, %s45
    %s47 = sphi 0, %s45
    %s48 = sphi 0, %s47
    %s62 = sphi 0, %s48
    %s66 = sphi 0, %s66
    %s68 = sphi 0, %s66
    %s69 = sphi 0, %s68
    %s83 = sphi 0, %s69
    %s87 = sphi 0, %s87
    %s89 = sphi 0, %s87
    %s90 = sphi 0, %s89
    %s104 = sphi 0, %s90
    %s108 = sphi 0, %s108
    %s110 = sphi 0, %s108
    %s111 = sphi 0, %s110
    %s125 = sphi 0, %s111
    %s131 = sphi 0, %s133
    %s134 = sphi 0, %s131
    %s135 = sphi 0, %s134
    %s151 = sphi 0, %s135
  $region4: #{basic_block_forward.1} parent=0 // loop_header_branch
    %14 = sbr.rel (%p12) target = $region8
  $region5: #{basic_block_forward.1} parent=0 // loop_body
    %s16 = ssub.s32 %s11, 1
    %s17 = ssub.s32 %s11, 2
    %s18 = sadd.s32 %s11, 1
    %s19 = ssub.s32 %s11, %s18
    %p20 = scmp.eq.s32.totalorder %s19, 0
    %s22 = sadd.s32 %s21, 1
    %s23 = scalar_select %p20, %s21, %s22
    %p26 = pneg %p20
    %p27 = scmp.eq.s32.totalorder %s11, 1
    %p28 = por %p26, %p27
    %p29 = scmp.ne.s32.totalorder %s21, %s24
    %p30 = scmp.eq.s32.totalorder %s11, 0
    %p31 = por %p29, %p30
    %p32 = scmp.ne.s32.totalorder %s21, %s24
    %p33 = scmp.eq.s32.totalorder %s16, 1
    %p34 = por %p32, %p33
    %p35 = scmp.ne.s32.totalorder %s24, %s25
    %p36 = scmp.eq.s32.totalorder %s16, 0
    %p37 = por %p35, %p36
    %p38 = scmp.ne.s32.totalorder %s24, %s25
    %p39 = scmp.eq.s32.totalorder %s17, 1
    %p40 = por %p38, %p39
    %p42 = scmp.ne.s32.totalorder %s25, %s41
    %p43 = scmp.eq.s32.totalorder %s17, 0
    %p44 = por %p42, %p43
    %s46 = sadd.s32 %s45, 1
    %p49 = scmp.eq.s32.totalorder %s11, 1
    %p50 = scmp.ne.s32.totalorder %s45, %s47
    %p51 = scmp.eq.s32.totalorder %s11, 0
    %p52 = por %p50, %p51
    %p53 = scmp.ne.s32.totalorder %s45, %s47
    %p54 = scmp.eq.s32.totalorder %s16, 1
    %p55 = por %p53, %p54
    %p56 = scmp.ne.s32.totalorder %s47, %s48
    %p57 = scmp.eq.s32.totalorder %s16, 0
    %p58 = por %p56, %p57
    %p59 = scmp.ne.s32.totalorder %s47, %s48
    %p60 = scmp.eq.s32.totalorder %s17, 1
    %p61 = por %p59, %p60
    %p63 = scmp.ne.s32.totalorder %s48, %s62
    %p64 = scmp.eq.s32.totalorder %s17, 0
    %p65 = por %p63, %p64
    %s67 = sadd.s32 %s66, 1
    %p70 = scmp.eq.s32.totalorder %s11, 1
    %p71 = scmp.ne.s32.totalorder %s66, %s68
    %p72 = scmp.eq.s32.totalorder %s11, 0
    %p73 = por %p71, %p72
    %p74 = scmp.ne.s32.totalorder %s66, %s68
    %p75 = scmp.eq.s32.totalorder %s16, 1
    %p76 = por %p74, %p75
    %p77 = scmp.ne.s32.totalorder %s68, %s69
    %p78 = scmp.eq.s32.totalorder %s16, 0
    %p79 = por %p77, %p78
    %p80 = scmp.ne.s32.totalorder %s68, %s69
    %p81 = scmp.eq.s32.totalorder %s17, 1
    %p82 = por %p80, %p81
    %p84 = scmp.ne.s32.totalorder %s69, %s83
    %p85 = scmp.eq.s32.totalorder %s17, 0
    %p86 = por %p84, %p85
    %s88 = sadd.s32 %s87, 1
    %p91 = scmp.eq.s32.totalorder %s11, 1
    %p92 = scmp.ne.s32.totalorder %s87, %s89
    %p93 = scmp.eq.s32.totalorder %s11, 0
    %p94 = por %p92, %p93
    %p95 = scmp.ne.s32.totalorder %s87, %s89
    %p96 = scmp.eq.s32.totalorder %s16, 1
    %p97 = por %p95, %p96
    %p98 = scmp.ne.s32.totalorder %s89, %s90
    %p99 = scmp.eq.s32.totalorder %s16, 0
    %p100 = por %p98, %p99
    %p101 = scmp.ne.s32.totalorder %s89, %s90
    %p102 = scmp.eq.s32.totalorder %s17, 1
    %p103 = por %p101, %p102
    %p105 = scmp.ne.s32.totalorder %s90, %s104
    %p106 = scmp.eq.s32.totalorder %s17, 0
    %p107 = por %p105, %p106
    %s109 = sadd.s32 %s108, 1
    %p112 = scmp.eq.s32.totalorder %s11, 1
    %p113 = scmp.ne.s32.totalorder %s108, %s110
    %p114 = scmp.eq.s32.totalorder %s11, 0
    %p115 = por %p113, %p114
    %p116 = scmp.ne.s32.totalorder %s108, %s110
    %p117 = scmp.eq.s32.totalorder %s16, 1
    %p118 = por %p116, %p117
    %p119 = scmp.ne.s32.totalorder %s110, %s111
    %p120 = scmp.eq.s32.totalorder %s16, 0
    %p121 = por %p119, %p120
    %p122 = scmp.ne.s32.totalorder %s110, %s111
    %p123 = scmp.eq.s32.totalorder %s17, 1
    %p124 = por %p122, %p123
    %p126 = scmp.ne.s32.totalorder %s111, %s125
    %p127 = scmp.eq.s32.totalorder %s17, 0
    %p128 = por %p126, %p127
    %s129 = ssub.s32 %s11, %s18
    %p130 = scmp.eq.s32.totalorder %s129, 0
    %s132 = sadd.s32 %s131, 1
    %s133 = scalar_select %p130, %s131, %s132
    %p136 = pneg %p130
    %p137 = scmp.eq.s32.totalorder %s11, 1
    %p138 = por %p136, %p137
    %p139 = scmp.ne.s32.totalorder %s131, %s134
    %p140 = scmp.eq.s32.totalorder %s11, 0
    %p141 = por %p139, %p140
    %p142 = scmp.ne.s32.totalorder %s131, %s134
    %p143 = scmp.eq.s32.totalorder %s16, 1
    %p144 = por %p142, %p143
    %p145 = scmp.ne.s32.totalorder %s134, %s135
    %p146 = scmp.eq.s32.totalorder %s16, 0
    %p147 = por %p145, %p146
    %p148 = scmp.ne.s32.totalorder %s134, %s135
    %p149 = scmp.eq.s32.totalorder %s17, 1
    %p150 = por %p148, %p149
    %p152 = scmp.ne.s32.totalorder %s135, %s151
    %p153 = scmp.eq.s32.totalorder %s17, 0
    %p154 = por %p152, %p153
    %p155 = scmp.le.s32.totalorder 1, %s11
    %p156 = scmp.lt.s32.totalorder %s11, 3
    %p157 = pnand %p155, %p156
    %p158 = pneg %p157
    // Predicated region
    $region9: #{basic_block_forward.1} parent=5 // pred_check
      _
    $region10: #{basic_block_forward.1} parent=5 // pred_check_branch
      %160 = sbr.rel (%p157) target = $region12
    $region11: #{basic_block_forward.1} parent=5 // pred_region
      %s161 = ssub.s32 %s11, 1
      // Predicated region
      $region13: #{basic_block_forward.1} parent=11 // pred_check
        %p162 = pneg %p58
      $region14: #{basic_block_forward.1} parent=11 // pred_check_branch
        %164 = sbr.rel (%p162) target = $region16
      $region15: #{basic_block_forward.1} parent=11 // pred_region
        _
      $region16: #{basic_block_forward.1} parent=11 // pred_fallthru
        _
      // Predicated region
      $region17: #{basic_block_forward.1} parent=11 // pred_check
        %p165 = pneg %p79
      $region18: #{basic_block_forward.1} parent=11 // pred_check_branch
        %167 = sbr.rel (%p165) target = $region20
      $region19: #{basic_block_forward.1} parent=11 // pred_region
        _
      $region20: #{basic_block_forward.1} parent=11 // pred_fallthru
        _
      // Predicated region
      $region21: #{basic_block_forward.1} parent=11 // pred_check
        %p168 = pneg %p100
      $region22: #{basic_block_forward.1} parent=11 // pred_check_branch
        %170 = sbr.rel (%p168) target = $region24
      $region23: #{basic_block_forward.1} parent=11 // pred_region
        _
      $region24: #{basic_block_forward.1} parent=11 // pred_fallthru
        _
      // Predicated region
      $region25: #{basic_block_forward.1} parent=11 // pred_check
        %p171 = pneg %p121
      $region26: #{basic_block_forward.1} parent=11 // pred_check_branch
        %173 = sbr.rel (%p171) target = $region28
      $region27: #{basic_block_forward.1} parent=11 // pred_region
        _
      $region28: #{basic_block_forward.1} parent=11 // pred_fallthru
        _
    $region12: #{basic_block_forward.1} parent=5 // pred_fallthru
      _
    %p174 = scmp.lt.s32.totalorder %s11, 2
    // Predicated region
    $region29: #{basic_block_forward.1} parent=5 // pred_check
      %p175 = pneg %p174
    $region30: #{basic_block_forward.1} parent=5 // pred_check_branch
      %177 = sbr.rel (%p175) target = $region32
    $region31: #{basic_block_forward.1} parent=5 // pred_region
      // Predicated region
      $region33: #{basic_block_forward.1} parent=31 // pred_check
        %p178 = pneg %p31
      $region34: #{basic_block_forward.1} parent=31 // pred_check_branch
        %180 = sbr.rel (%p178) target = $region36
      $region35: #{basic_block_forward.1} parent=31 // pred_region
        %p181 = scmp.lt.s32.totalorder %s11, 1
        %s182 = scalar_select %p181, %s11, 1
        %s183 = smul.addr %s182, 2
        %s184 = smul.addr %s183, 4
        %s185 = scalar_lea.vmem %s0, %s184
      $region36: #{basic_block_forward.1} parent=31 // pred_fallthru
        _
    $region32: #{basic_block_forward.1} parent=5 // pred_fallthru
      _
    %p186 = scmp.le.s32.totalorder 1, %s11
    %p187 = scmp.lt.s32.totalorder %s11, 3
    %p188 = pnand %p186, %p187
    %p189 = pneg %p188
    // Predicated region
    $region37: #{basic_block_forward.1} parent=5 // pred_check
      _
    $region38: #{basic_block_forward.1} parent=5 // pred_check_branch
      %191 = sbr.rel (%p188) target = $region40
    $region39: #{basic_block_forward.1} parent=5 // pred_region
      %s192 = ssub.s32 %s11, 1
      %p193 = scmp.lt.s32.totalorder %s16, 1
      %s194 = scalar_select %p193, %s16, 1
      %s195 = smul.addr %s194, 2
      %s196 = smul.addr %s195, 4
      %s197 = scalar_lea.vmem %s0, %s196
      %p198 = pneg %p37
      %p199 = pneg %p34
      %p200 = pneg %p58
      %p201 = pneg %p55
      %p202 = pneg %p79
      %p203 = pneg %p76
      %p204 = pneg %p100
      %p205 = pneg %p97
      %p206 = pneg %p121
      %p207 = pneg %p118
      %p208 = pneg %p147
      %p209 = pneg %p144
      %p210 = scmp.lt.s32.totalorder %s16, 1
      %s211 = scalar_select %p210, %s16, 1
      %s212 = smul.addr %s211, 2
      %s213 = smul.addr %s212, 4
      %s214 = scalar_lea.vmem %s5, %s213
      %p215 = scmp.lt.s32.totalorder %s16, 1
      %s216 = scalar_select %p215, %s16, 1
      %s217 = smul.addr %s216, 2
      %s218 = smul.addr %s217, 4
      %s219 = scalar_lea.vmem %s0, %s218
      %p220 = scmp.lt.s32.totalorder %s16, 1
      %s221 = scalar_select %p220, %s16, 1
      %s222 = smul.addr %s221, 2
      %s223 = smul.addr %s222, 4
      %s224 = scalar_lea.vmem %s5, %s223
      %v226 = vlaneseq
      %v227 = vand.u32 %v226, 127
      %v228 = vadd.s32 %v227, 128
      %vm229 = vcmp.lt.s32.totalorder %v227, 0
      %v230 = vsub.s32 0, %v227
      %v231 = vsel %vm229, %v230, %v227
      %v232 = vshrl.u32 %v231, 4
      %v233 = vand.u32 %v231, 15
      %v234 = vsub.s32 0, %v233
      %v235 = vsel %vm229, %v234, %v233
      %vm236 = vcmp.lt.s32.totalorder %v228, 0
      %v237 = vsub.s32 0, %v228
      %v238 = vsel %vm236, %v237, %v228
      %v239 = vshrl.u32 %v238, 4
      %v240 = vand.u32 %v238, 15
      %v241 = vsub.s32 0, %v240
      %v242 = vsel %vm236, %v241, %v240
      %vm243 = vcmp.ne.s32.totalorder %v235, 0
      %vm244 = vcmp.ne.s32.totalorder %v242, 0
      %vm245 = vcmp.lt.s32.totalorder %v235, 0
      %vm246 = vcmp.lt.s32.totalorder %v242, 0
      %vm247 = vmand %vm245, %vm243
      %vm248 = vmand %vm246, %vm244
      %v249 = vadd.s32 %v235, 16
      %v250 = vadd.s32 %v242, 16
      %v251 = vsel %vm247, %v249, %v235
      %v252 = vsel %vm248, %v250, %v242
      %vm253 = vcmp.ge.s32.totalorder %v251, 1
      %vm254 = vcmp.ge.s32.totalorder %v252, 1
      %vm255 = vcmp.le.s32.totalorder %v251, 14
      %vm256 = vcmp.le.s32.totalorder %v252, 14
      %v257 = vld [vmem:[%s219] sm:$0xff]
      %259 = vst [vmem:[#allocation1] ss:$2 sm:$0xff] %v257
      %v260 = vld.sshfl [vmem:[#allocation1] sm:$0xff pattern:$0x75316420]
      %v261 = vld.sshfl [vmem:[#allocation1 + $0x8] sm:$0xff pattern:$0x75316420]
      %262 = vrot.lane.b32.xlu0 %v260, 17
      %v263 = vpop.permute.xlu0 %262
      %264 = vrot.lane.b32.xlu0 %v261, 17
      %v265 = vpop.permute.xlu0 %264
      %vm266 = vcmask 138240
      %v267 = vsel %vm266, %v263, %v265
      %v270 = vsel %vm266, 0.0, %v263
      %v271 = vsel %vm253, 1, 0
      %v272 = vsel %vm254, 1, 0
      %vm273 = vcmp.eq.s32.totalorder %v271, 1
      %vm274 = vcmp.eq.s32.totalorder %v272, 1
      %v275 = vsel %vm273, %v270, 0.0
      %v276 = vsel %vm274, %v267, 0.0
      %277 = vst [vmem:[#allocation1] ss:$2 sm:$0xff] %v257
      %v278 = vld.sshfl [vmem:[#allocation1] sm:$0xff pattern:$0x75316420]
      %v279 = vld.sshfl [vmem:[#allocation1 + $0x8] sm:$0xff pattern:$0x75316420]
      %280 = vrot.lane.b32.xlu0 %v278, 16
      %v281 = vpop.permute.xlu0 %280
      %282 = vrot.lane.b32.xlu0 %v279, 16
      %v283 = vpop.permute.xlu0 %282
      %vm284 = vcmask 130048
      %v285 = vsel %vm284, %v281, %v283
      %v288 = vsel %vm284, 0.0, %v281
      %289 = vst [vmem:[#allocation1] ss:$2 sm:$0xff] %v257
      %v290 = vld.sshfl [vmem:[#allocation1] sm:$0xff pattern:$0x75316420]
      %v291 = vld.sshfl [vmem:[#allocation1 + $0x8] sm:$0xff pattern:$0x75316420]
      %292 = vrot.lane.b32.xlu0 %v290, 15
      %v293 = vpop.permute.xlu0 %292
      %294 = vrot.lane.b32.xlu0 %v291, 15
      %v295 = vpop.permute.xlu0 %294
      %vm296 = vcmask 121856
      %v297 = vsel %vm296, %v293, %v295
      %v300 = vsel %vm296, 0.0, %v293
      %v301 = vsel %vm255, 1, 0
      %v302 = vsel %vm256, 1, 0
      %vm303 = vcmp.eq.s32.totalorder %v301, 1
      %vm304 = vcmp.eq.s32.totalorder %v302, 1
      %v305 = vsel %vm303, %v300, 0.0
      %v306 = vsel %vm304, %v297, 0.0
      %307 = vst [vmem:[#allocation1] ss:$2 sm:$0xff] %v257
      %v308 = vld.sshfl [vmem:[#allocation1] sm:$0xff pattern:$0x75316420]
      %v309 = vld.sshfl [vmem:[#allocation1 + $0x8] sm:$0xff pattern:$0x75316420]
      %310 = vrot.lane.b32.xlu0 %v308, 1
      %v311 = vpop.permute.xlu0 %310
      %312 = vrot.lane.b32.xlu0 %v309, 1
      %v313 = vpop.permute.xlu0 %312
      %vm314 = vcmask 7168
      %v315 = vsel %vm314, %v311, %v313
      %v318 = vsel %vm314, 0.0, %v311
      %v319 = vsel %vm273, %v318, 0.0
      %v320 = vsel %vm274, %v315, 0.0
      %321 = vst [vmem:[#allocation1] ss:$2 sm:$0xff] %v257
      %v322 = vld.sshfl [vmem:[#allocation1] sm:$0xff pattern:$0x75316420]
      %v323 = vld.sshfl [vmem:[#allocation1 + $0x8] sm:$0xff pattern:$0x75316420]
      %324 = vrot.lane.b32.xlu0 %v322, 127
      %v325 = vpop.permute.xlu0 %324
      %326 = vrot.lane.b32.xlu0 %v323, 127
      %v327 = vpop.permute.xlu0 %326
      %vm328 = vcmask 1039360
      %v329 = vsel %vm328, %v325, %v327
      %v332 = vsel %vm328, %v327, 0.0
      %v333 = vsel %vm303, %v329, 0.0
      %v334 = vsel %vm304, %v332, 0.0
      %335 = vst [vmem:[#allocation1] ss:$2 sm:$0xff] %v257
      %v336 = vld.sshfl [vmem:[#allocation1] sm:$0xff pattern:$0x75316420]
      %v337 = vld.sshfl [vmem:[#allocation1 + $0x8] sm:$0xff pattern:$0x75316420]
      %338 = vrot.lane.b32.xlu0 %v336, 113
      %v339 = vpop.permute.xlu0 %338
      %340 = vrot.lane.b32.xlu0 %v337, 113
      %v341 = vpop.permute.xlu0 %340
      %vm342 = vcmask 924672
      %v343 = vsel %vm342, %v339, %v341
      %v346 = vsel %vm342, %v341, 0.0
      %v347 = vsel %vm273, %v343, 0.0
      %v348 = vsel %vm274, %v346, 0.0
      %349 = vst [vmem:[#allocation1] ss:$2 sm:$0xff] %v257
      %v350 = vld.sshfl [vmem:[#allocation1] sm:$0xff pattern:$0x75316420]
      %v351 = vld.sshfl [vmem:[#allocation1 + $0x8] sm:$0xff pattern:$0x75316420]
      %352 = vrot.lane.b32.xlu0 %v350, 112
      %v353 = vpop.permute.xlu0 %352
      %354 = vrot.lane.b32.xlu0 %v351, 112
      %v355 = vpop.permute.xlu0 %354
      %vm356 = vcmask 916480
      %v357 = vsel %vm356, %v353, %v355
      %v360 = vsel %vm356, %v355, 0.0
      %361 = vst [vmem:[#allocation1] ss:$2 sm:$0xff] %v257
      %v362 = vld.sshfl [vmem:[#allocation1] sm:$0xff pattern:$0x75316420]
      %v363 = vld.sshfl [vmem:[#allocation1 + $0x8] sm:$0xff pattern:$0x75316420]
      %364 = vrot.lane.b32.xlu0 %v362, 111
      %v365 = vpop.permute.xlu0 %364
      %366 = vrot.lane.b32.xlu0 %v363, 111
      %v367 = vpop.permute.xlu0 %366
      %vm368 = vcmask 908288
      %v369 = vsel %vm368, %v365, %v367
      %v372 = vsel %vm368, %v367, 0.0
      %v373 = vsel %vm303, %v369, 0.0
      %v374 = vsel %vm304, %v372, 0.0
      %v375 = vld [vmem:[%s1] sm:$0x3]
      %v376 = vpack.c.bf16 %v275, %v275
      %v377 = vpack.c.bf16 %v276, %v276
      %v378 = vpack.c.bf16 %v288, %v288
      %v379 = vpack.c.bf16 %v285, %v285
      %381 = vst [vmem:[#allocation1] ss:$4 sm:$0xff] %v375
      %v382 = vld.sshfl [vmem:[#allocation1] sm:$0xff pattern:$0x73625140]
      %384 = vrot.lane.b32.xlu0 %v382, 124
      %v385 = vpop.permute.xlu0 %384
      %vm386 = vcmask 31744
      %v388 = vsel %vm386, %v385, 0
      %vm390 = vcmask 1041408
      %v392 = vsel %vm390, %v378, 0
      %v395 = vsel %vm390, %v379, 0
      %397 = vmatpush.bf16.msra.mxu0 0
      %398 = vmatpush.bf16.msra.mxu0 0
      %399 = vmatpush.bf16.msra.mxu0 0
      %400 = vmatpush.bf16.msra.mxu0 0
      %401 = vmatpush.bf16.msra.mxu0 0
      %402 = vmatpush.bf16.msra.mxu0 0
      %403 = vmatpush.bf16.msra.mxu0 0
      %404 = vmatpush.bf16.msra.mxu0 %v392
      %405 = vmatmul.bf16.gmra.mxu0 %v388
      %v406 = vpop.f32.mrf.mxu0
      %v407 = vadd.f32 0.0, %v406
      %v408 = vpop.f32.mrf.mxu0
      %409 = vdwg.mxu0
      %410 = vmatpush.bf16.msra.mxu0 0
      %411 = vmatpush.bf16.msra.mxu0 0
      %412 = vmatpush.bf16.msra.mxu0 0
      %413 = vmatpush.bf16.msra.mxu0 0
      %414 = vmatpush.bf16.msra.mxu0 0
      %415 = vmatpush.bf16.msra.mxu0 0
      %416 = vmatpush.bf16.msra.mxu0 0
      %417 = vmatpush.bf16.msra.mxu0 %v395
      %418 = vmatmul.bf16.gmra.mxu0 %v388
      %v419 = vpop.f32.mrf.mxu0
      %v420 = vadd.f32 0.0, %v419
      %v421 = vpop.f32.mrf.mxu0
      %422 = vdwg.mxu0
      %v423 = vsel %vm386, %v375, 0
      %v426 = vsel %vm390, %v376, 0
      %v429 = vsel %vm390, %v377, 0
      %431 = vmatpush.bf16.msra.mxu0 0
      %432 = vmatpush.bf16.msra.mxu0 0
      %433 = vmatpush.bf16.msra.mxu0 0
      %434 = vmatpush.bf16.msra.mxu0 0
      %435 = vmatpush.bf16.msra.mxu0 0
      %436 = vmatpush.bf16.msra.mxu0 0
      %437 = vmatpush.bf16.msra.mxu0 0
      %438 = vmatpush.bf16.msra.mxu0 %v426
      %439 = vmatmul.bf16.gmra.mxu0 %v423
      %v440 = vpop.f32.mrf.mxu0
      %v441 = vadd.f32 %v407, %v440
      %v442 = vpop.f32.mrf.mxu0
      %443 = vdwg.mxu0
      %444 = vmatpush.bf16.msra.mxu0 0
      %445 = vmatpush.bf16.msra.mxu0 0
      %446 = vmatpush.bf16.msra.mxu0 0
      %447 = vmatpush.bf16.msra.mxu0 0
      %448 = vmatpush.bf16.msra.mxu0 0
      %449 = vmatpush.bf16.msra.mxu0 0
      %450 = vmatpush.bf16.msra.mxu0 0
      %451 = vmatpush.bf16.msra.mxu0 %v429
      %452 = vmatmul.bf16.gmra.mxu0 %v423
      %v453 = vpop.f32.mrf.mxu0
      %v454 = vadd.f32 %v420, %v453
      %v455 = vpop.f32.mrf.mxu0
      %456 = vdwg.mxu0
      %v457 = vld [vmem:[%s1] sm:$0x3]
      %v458 = vpack.c.bf16 %v305, %v305
      %v459 = vpack.c.bf16 %v306, %v306
      %461 = vst [vmem:[#allocation1] ss:$4 sm:$0xff] %v457
      %v462 = vld.sshfl [vmem:[#allocation1] sm:$0xff pattern:$0x73625140]
      %464 = vrot.lane.b32.xlu0 %v462, 120
      %v465 = vpop.permute.xlu0 %464
      %v467 = vsel %vm386, %v465, 0
      %v470 = vsel %vm390, %v458, 0
      %v473 = vsel %vm390, %v459, 0
      %475 = vmatpush.bf16.msra.mxu0 0
      %476 = vmatpush.bf16.msra.mxu0 0
      %477 = vmatpush.bf16.msra.mxu0 0
      %478 = vmatpush.bf16.msra.mxu0 0
      %479 = vmatpush.bf16.msra.mxu0 0
      %480 = vmatpush.bf16.msra.mxu0 0
      %481 = vmatpush.bf16.msra.mxu0 0
      %482 = vmatpush.bf16.msra.mxu0 %v470
      %483 = vmatmul.bf16.gmra.mxu0 %v467
      %v484 = vpop.f32.mrf.mxu0
      %v485 = vadd.f32 0.0, %v484
      %v486 = vpop.f32.mrf.mxu0
      %487 = vdwg.mxu0
      %488 = vmatpush.bf16.msra.mxu0 0
      %489 = vmatpush.bf16.msra.mxu0 0
      %490 = vmatpush.bf16.msra.mxu0 0
      %491 = vmatpush.bf16.msra.mxu0 0
      %492 = vmatpush.bf16.msra.mxu0 0
      %493 = vmatpush.bf16.msra.mxu0 0
      %494 = vmatpush.bf16.msra.mxu0 0
      %495 = vmatpush.bf16.msra.mxu0 %v473
      %496 = vmatmul.bf16.gmra.mxu0 %v467
      %v497 = vpop.f32.mrf.mxu0
      %v498 = vadd.f32 0.0, %v497
      %v499 = vpop.f32.mrf.mxu0
      %500 = vdwg.mxu0
      %v501 = vadd.f32 %v441, %v485
      %v502 = vadd.f32 %v454, %v498
      %v503 = vld [vmem:[%s1] sm:$0x3]
      %v504 = vpack.c.bf16 %v319, %v319
      %v505 = vpack.c.bf16 %v320, %v320
      %507 = vst [vmem:[#allocation1] ss:$4 sm:$0xff] %v503
      %v508 = vld.sshfl [vmem:[#allocation1] sm:$0xff pattern:$0x73625140]
      %510 = vrot.lane.b32.xlu0 %v508, 116
      %v511 = vpop.permute.xlu0 %510
      %v513 = vsel %vm386, %v511, 0
      %v516 = vsel %vm390, %v504, 0
      %v519 = vsel %vm390, %v505, 0
      %521 = vmatpush.bf16.msra.mxu0 0
      %522 = vmatpush.bf16.msra.mxu0 0
      %523 = vmatpush.bf16.msra.mxu0 0
      %524 = vmatpush.bf16.msra.mxu0 0
      %525 = vmatpush.bf16.msra.mxu0 0
      %526 = vmatpush.bf16.msra.mxu0 0
      %527 = vmatpush.bf16.msra.mxu0 0
      %528 = vmatpush.bf16.msra.mxu0 %v516
      %529 = vmatmul.bf16.gmra.mxu0 %v513
      %v530 = vpop.f32.mrf.mxu0
      %v531 = vadd.f32 0.0, %v530
      %v532 = vpop.f32.mrf.mxu0
      %533 = vdwg.mxu0
      %534 = vmatpush.bf16.msra.mxu0 0
      %535 = vmatpush.bf16.msra.mxu0 0
      %536 = vmatpush.bf16.msra.mxu0 0
      %537 = vmatpush.bf16.msra.mxu0 0
      %538 = vmatpush.bf16.msra.mxu0 0
      %539 = vmatpush.bf16.msra.mxu0 0
      %540 = vmatpush.bf16.msra.mxu0 0
      %541 = vmatpush.bf16.msra.mxu0 %v519
      %542 = vmatmul.bf16.gmra.mxu0 %v513
      %v543 = vpop.f32.mrf.mxu0
      %v544 = vadd.f32 0.0, %v543
      %v545 = vpop.f32.mrf.mxu0
      %546 = vdwg.mxu0
      %v547 = vadd.f32 %v501, %v531
      %v548 = vadd.f32 %v502, %v544
      %v549 = vld [vmem:[%s1] sm:$0x3]
      %550 = vst [vmem:[#allocation1] ss:$2 sm:$0xff] %v257
      %v551 = vld.sshfl [vmem:[#allocation1] sm:$0xff pattern:$0x75316420]
      %v552 = vld.sshfl [vmem:[#allocation1 + $0x8] sm:$0xff pattern:$0x75316420]
      %v555 = vpack.c.bf16 %v551, %v551
      %v556 = vpack.c.bf16 %v552, %v552
      %558 = vst [vmem:[#allocation1] ss:$4 sm:$0xff] %v549
      %v559 = vld.sshfl [vmem:[#allocation1] sm:$0xff pattern:$0x73625140]
      %561 = vrot.lane.b32.xlu0 %v559, 112
      %v562 = vpop.permute.xlu0 %561
      %v564 = vsel %vm386, %v562, 0
      %v567 = vsel %vm390, %v555, 0
      %v570 = vsel %vm390, %v556, 0
      %572 = vmatpush.bf16.msra.mxu0 0
      %573 = vmatpush.bf16.msra.mxu0 0
      %574 = vmatpush.bf16.msra.mxu0 0
      %575 = vmatpush.bf16.msra.mxu0 0
      %576 = vmatpush.bf16.msra.mxu0 0
      %577 = vmatpush.bf16.msra.mxu0 0
      %578 = vmatpush.bf16.msra.mxu0 0
      %579 = vmatpush.bf16.msra.mxu0 %v567
      %580 = vmatmul.bf16.gmra.mxu0 %v564
      %v581 = vpop.f32.mrf.mxu0
      %v582 = vadd.f32 0.0, %v581
      %v583 = vpop.f32.mrf.mxu0
      %584 = vdwg.mxu0
      %585 = vmatpush.bf16.msra.mxu0 0
      %586 = vmatpush.bf16.msra.mxu0 0
      %587 = vmatpush.bf16.msra.mxu0 0
      %588 = vmatpush.bf16.msra.mxu0 0
      %589 = vmatpush.bf16.msra.mxu0 0
      %590 = vmatpush.bf16.msra.mxu0 0
      %591 = vmatpush.bf16.msra.mxu0 0
      %592 = vmatpush.bf16.msra.mxu0 %v570
      %593 = vmatmul.bf16.gmra.mxu0 %v564
      %v594 = vpop.f32.mrf.mxu0
      %v595 = vadd.f32 0.0, %v594
      %v596 = vpop.f32.mrf.mxu0
      %597 = vdwg.mxu0
      %v598 = vadd.f32 %v547, %v582
      %v599 = vadd.f32 %v548, %v595
      %v600 = vld [vmem:[%s1] sm:$0x3]
      %v601 = vpack.c.bf16 %v333, %v333
      %v602 = vpack.c.bf16 %v334, %v334
      %604 = vst [vmem:[#allocation1] ss:$4 sm:$0xff] %v600
      %v605 = vld.sshfl [vmem:[#allocation1] sm:$0xff pattern:$0x73625140]
      %607 = vrot.lane.b32.xlu0 %v605, 108
      %v608 = vpop.permute.xlu0 %607
      %v610 = vsel %vm386, %v608, 0
      %v613 = vsel %vm390, %v601, 0
      %v616 = vsel %vm390, %v602, 0
      %618 = vmatpush.bf16.msra.mxu0 0
      %619 = vmatpush.bf16.msra.mxu0 0
      %620 = vmatpush.bf16.msra.mxu0 0
      %621 = vmatpush.bf16.msra.mxu0 0
      %622 = vmatpush.bf16.msra.mxu0 0
      %623 = vmatpush.bf16.msra.mxu0 0
      %624 = vmatpush.bf16.msra.mxu0 0
      %625 = vmatpush.bf16.msra.mxu0 %v613
      %626 = vmatmul.bf16.gmra.mxu0 %v610
      %v627 = vpop.f32.mrf.mxu0
      %v628 = vadd.f32 0.0, %v627
      %v629 = vpop.f32.mrf.mxu0
      %630 = vdwg.mxu0
      %631 = vmatpush.bf16.msra.mxu0 0
      %632 = vmatpush.bf16.msra.mxu0 0
      %633 = vmatpush.bf16.msra.mxu0 0
      %634 = vmatpush.bf16.msra.mxu0 0
      %635 = vmatpush.bf16.msra.mxu0 0
      %636 = vmatpush.bf16.msra.mxu0 0
      %637 = vmatpush.bf16.msra.mxu0 0
      %638 = vmatpush.bf16.msra.mxu0 %v616
      %639 = vmatmul.bf16.gmra.mxu0 %v610
      %v640 = vpop.f32.mrf.mxu0
      %v641 = vadd.f32 0.0, %v640
      %v642 = vpop.f32.mrf.mxu0
      %643 = vdwg.mxu0
      %v644 = vadd.f32 %v598, %v628
      %v645 = vadd.f32 %v599, %v641
      %v646 = vld [vmem:[%s1] sm:$0x3]
      %v647 = vpack.c.bf16 %v347, %v347
      %v648 = vpack.c.bf16 %v348, %v348
      %650 = vst [vmem:[#allocation1] ss:$4 sm:$0xff] %v646
      %v651 = vld.sshfl [vmem:[#allocation1] sm:$0xff pattern:$0x73625140]
      %653 = vrot.lane.b32.xlu0 %v651, 104
      %v654 = vpop.permute.xlu0 %653
      %v656 = vsel %vm386, %v654, 0
      %v659 = vsel %vm390, %v647, 0
      %v662 = vsel %vm390, %v648, 0
      %664 = vmatpush.bf16.msra.mxu0 0
      %665 = vmatpush.bf16.msra.mxu0 0
      %666 = vmatpush.bf16.msra.mxu0 0
      %667 = vmatpush.bf16.msra.mxu0 0
      %668 = vmatpush.bf16.msra.mxu0 0
      %669 = vmatpush.bf16.msra.mxu0 0
      %670 = vmatpush.bf16.msra.mxu0 0
      %671 = vmatpush.bf16.msra.mxu0 %v659
      %672 = vmatmul.bf16.gmra.mxu0 %v656
      %v673 = vpop.f32.mrf.mxu0
      %v674 = vadd.f32 0.0, %v673
      %v675 = vpop.f32.mrf.mxu0
      %676 = vdwg.mxu0
      %677 = vmatpush.bf16.msra.mxu0 0
      %678 = vmatpush.bf16.msra.mxu0 0
      %679 = vmatpush.bf16.msra.mxu0 0
      %680 = vmatpush.bf16.msra.mxu0 0
      %681 = vmatpush.bf16.msra.mxu0 0
      %682 = vmatpush.bf16.msra.mxu0 0
      %683 = vmatpush.bf16.msra.mxu0 0
      %684 = vmatpush.bf16.msra.mxu0 %v662
      %685 = vmatmul.bf16.gmra.mxu0 %v656
      %v686 = vpop.f32.mrf.mxu0
      %v687 = vadd.f32 0.0, %v686
      %v688 = vpop.f32.mrf.mxu0
      %689 = vdwg.mxu0
      %v690 = vadd.f32 %v644, %v674
      %v691 = vadd.f32 %v645, %v687
      %v692 = vld [vmem:[%s1] sm:$0x3]
      %v693 = vpack.c.bf16 %v357, %v357
      %v694 = vpack.c.bf16 %v360, %v360
      %696 = vst [vmem:[#allocation1] ss:$4 sm:$0xff] %v692
      %v697 = vld.sshfl [vmem:[#allocation1] sm:$0xff pattern:$0x73625140]
      %699 = vrot.lane.b32.xlu0 %v697, 100
      %v700 = vpop.permute.xlu0 %699
      %v702 = vsel %vm386, %v700, 0
      %v705 = vsel %vm390, %v693, 0
      %v708 = vsel %vm390, %v694, 0
      %710 = vmatpush.bf16.msra.mxu0 0
      %711 = vmatpush.bf16.msra.mxu0 0
      %712 = vmatpush.bf16.msra.mxu0 0
      %713 = vmatpush.bf16.msra.mxu0 0
      %714 = vmatpush.bf16.msra.mxu0 0
      %715 = vmatpush.bf16.msra.mxu0 0
      %716 = vmatpush.bf16.msra.mxu0 0
      %717 = vmatpush.bf16.msra.mxu0 %v705
      %718 = vmatmul.bf16.gmra.mxu0 %v702
      %v719 = vpop.f32.mrf.mxu0
      %v720 = vadd.f32 0.0, %v719
      %v721 = vpop.f32.mrf.mxu0
      %722 = vdwg.mxu0
      %723 = vmatpush.bf16.msra.mxu0 0
      %724 = vmatpush.bf16.msra.mxu0 0
      %725 = vmatpush.bf16.msra.mxu0 0
      %726 = vmatpush.bf16.msra.mxu0 0
      %727 = vmatpush.bf16.msra.mxu0 0
      %728 = vmatpush.bf16.msra.mxu0 0
      %729 = vmatpush.bf16.msra.mxu0 0
      %730 = vmatpush.bf16.msra.mxu0 %v708
      %731 = vmatmul.bf16.gmra.mxu0 %v702
      %v732 = vpop.f32.mrf.mxu0
      %v733 = vadd.f32 0.0, %v732
      %v734 = vpop.f32.mrf.mxu0
      %735 = vdwg.mxu0
      %v736 = vadd.f32 %v690, %v720
      %v737 = vadd.f32 %v691, %v733
      %v738 = vld [vmem:[%s1] sm:$0x3]
      %v739 = vpack.c.bf16 %v373, %v373
      %v740 = vpack.c.bf16 %v374, %v374
      %742 = vst [vmem:[#allocation1] ss:$4 sm:$0xff] %v738
      %v743 = vld.sshfl [vmem:[#allocation1] sm:$0xff pattern:$0x73625140]
      %745 = vrot.lane.b32.xlu0 %v743, 96
      %v746 = vpop.permute.xlu0 %745
      %v748 = vsel %vm386, %v746, 0
      %v751 = vsel %vm390, %v739, 0
      %v754 = vsel %vm390, %v740, 0
      %756 = vmatpush.bf16.msra.mxu0 0
      %757 = vmatpush.bf16.msra.mxu0 0
      %758 = vmatpush.bf16.msra.mxu0 0
      %759 = vmatpush.bf16.msra.mxu0 0
      %760 = vmatpush.bf16.msra.mxu0 0
      %761 = vmatpush.bf16.msra.mxu0 0
      %762 = vmatpush.bf16.msra.mxu0 0
      %763 = vmatpush.bf16.msra.mxu0 %v751
      %764 = vmatmul.bf16.gmra.mxu0 %v748
      %v765 = vpop.f32.mrf.mxu0
      %v766 = vadd.f32 0.0, %v765
      %v767 = vpop.f32.mrf.mxu0
      %768 = vdwg.mxu0
      %769 = vmatpush.bf16.msra.mxu0 0
      %770 = vmatpush.bf16.msra.mxu0 0
      %771 = vmatpush.bf16.msra.mxu0 0
      %772 = vmatpush.bf16.msra.mxu0 0
      %773 = vmatpush.bf16.msra.mxu0 0
      %774 = vmatpush.bf16.msra.mxu0 0
      %775 = vmatpush.bf16.msra.mxu0 0
      %776 = vmatpush.bf16.msra.mxu0 %v754
      %777 = vmatmul.bf16.gmra.mxu0 %v748
      %v778 = vpop.f32.mrf.mxu0
      %v779 = vadd.f32 0.0, %v778
      %v780 = vpop.f32.mrf.mxu0
      %781 = vdwg.mxu0
      %v782 = vadd.f32 %v736, %v766
      %v783 = vadd.f32 %v737, %v779
      %v784 = vld [vmem:[%s2] sm:$0xf]
      %786 = vset.pattern.permute.xlu0 0
      %787 = vperm.xlu0 %786, %v784
      %v788 = vpop.permute.xlu0 %787
      %v790 = vadd.f32 %v782, %v788
      %v791 = vadd.f32 %v783, %v788
      %v792 = vmax.f32 %v790, 0.0
      %v793 = vmax.f32 %v791, 0.0
      %796 = vrot.lane.b32.xlu0 %v792, 17
      %v797 = vpop.permute.xlu0 %796
      %798 = vrot.lane.b32.xlu0 %v793, 17
      %v799 = vpop.permute.xlu0 %798
      %v800 = vsel %vm266, %v797, %v799
      %v803 = vsel %vm266, 0.0, %v797
      %v804 = vsel %vm273, %v803, 0.0
      %v805 = vsel %vm274, %v800, 0.0
      %806 = vrot.lane.b32.xlu0 %v792, 16
      %v807 = vpop.permute.xlu0 %806
      %808 = vrot.lane.b32.xlu0 %v793, 16
      %v809 = vpop.permute.xlu0 %808
      %v810 = vsel %vm284, %v807, %v809
      %v813 = vsel %vm284, 0.0, %v807
      %814 = vrot.lane.b32.xlu0 %v792, 15
      %v815 = vpop.permute.xlu0 %814
      %816 = vrot.lane.b32.xlu0 %v793, 15
      %v817 = vpop.permute.xlu0 %816
      %v818 = vsel %vm296, %v815, %v817
      %v821 = vsel %vm296, 0.0, %v815
      %v822 = vsel %vm303, %v821, 0.0
      %v823 = vsel %vm304, %v818, 0.0
      %824 = vrot.lane.b32.xlu0 %v792, 1
      %v825 = vpop.permute.xlu0 %824
      %826 = vrot.lane.b32.xlu0 %v793, 1
      %v827 = vpop.permute.xlu0 %826
      %v828 = vsel %vm314, %v825, %v827
      %v831 = vsel %vm314, 0.0, %v825
      %v832 = vsel %vm273, %v831, 0.0
      %v833 = vsel %vm274, %v828, 0.0
      %834 = vrot.lane.b32.xlu0 %v792, 127
      %v835 = vpop.permute.xlu0 %834
      %836 = vrot.lane.b32.xlu0 %v793, 127
      %v837 = vpop.permute.xlu0 %836
      %v838 = vsel %vm328, %v835, %v837
      %v841 = vsel %vm328, %v837, 0.0
      %v842 = vsel %vm303, %v838, 0.0
      %v843 = vsel %vm304, %v841, 0.0
      %844 = vrot.lane.b32.xlu0 %v792, 113
      %v845 = vpop.permute.xlu0 %844
      %846 = vrot.lane.b32.xlu0 %v793, 113
      %v847 = vpop.permute.xlu0 %846
      %v848 = vsel %vm342, %v845, %v847
      %v851 = vsel %vm342, %v847, 0.0
      %v852 = vsel %vm273, %v848, 0.0
      %v853 = vsel %vm274, %v851, 0.0
      %854 = vrot.lane.b32.xlu0 %v792, 112
      %v855 = vpop.permute.xlu0 %854
      %856 = vrot.lane.b32.xlu0 %v793, 112
      %v857 = vpop.permute.xlu0 %856
      %v858 = vsel %vm356, %v855, %v857
      %v861 = vsel %vm356, %v857, 0.0
      %862 = vrot.lane.b32.xlu0 %v792, 111
      %v863 = vpop.permute.xlu0 %862
      %864 = vrot.lane.b32.xlu0 %v793, 111
      %v865 = vpop.permute.xlu0 %864
      %v866 = vsel %vm368, %v863, %v865
      %v869 = vsel %vm368, %v865, 0.0
      %v870 = vsel %vm303, %v866, 0.0
      %v871 = vsel %vm304, %v869, 0.0
      %v872 = vld [vmem:[%s3] sm:$0x3]
      %v873 = vpack.c.bf16 %v804, %v804
      %v874 = vpack.c.bf16 %v805, %v805
      %v875 = vpack.c.bf16 %v813, %v813
      %v876 = vpack.c.bf16 %v810, %v810
      %878 = vst [vmem:[#allocation1] ss:$4 sm:$0xff] %v872
      %v879 = vld.sshfl [vmem:[#allocation1] sm:$0xff pattern:$0x73625140]
      %881 = vrot.lane.b32.xlu0 %v879, 124
      %v882 = vpop.permute.xlu0 %881
      %v884 = vsel %vm386, %v882, 0
      %v887 = vsel %vm390, %v875, 0
      %v890 = vsel %vm390, %v876, 0
      %892 = vmatpush.bf16.msra.mxu0 0
      %893 = vmatpush.bf16.msra.mxu0 0
      %894 = vmatpush.bf16.msra.mxu0 0
      %895 = vmatpush.bf16.msra.mxu0 0
      %896 = vmatpush.bf16.msra.mxu0 0
      %897 = vmatpush.bf16.msra.mxu0 0
      %898 = vmatpush.bf16.msra.mxu0 0
      %899 = vmatpush.bf16.msra.mxu0 %v887
      %900 = vmatmul.bf16.gmra.mxu0 %v884
      %v901 = vpop.f32.mrf.mxu0
      %v902 = vadd.f32 0.0, %v901
      %v903 = vpop.f32.mrf.mxu0
      %904 = vdwg.mxu0
      %905 = vmatpush.bf16.msra.mxu0 0
      %906 = vmatpush.bf16.msra.mxu0 0
      %907 = vmatpush.bf16.msra.mxu0 0
      %908 = vmatpush.bf16.msra.mxu0 0
      %909 = vmatpush.bf16.msra.mxu0 0
      %910 = vmatpush.bf16.msra.mxu0 0
      %911 = vmatpush.bf16.msra.mxu0 0
      %912 = vmatpush.bf16.msra.mxu0 %v890
      %913 = vmatmul.bf16.gmra.mxu0 %v884
      %v914 = vpop.f32.mrf.mxu0
      %v915 = vadd.f32 0.0, %v914
      %v916 = vpop.f32.mrf.mxu0
      %917 = vdwg.mxu0
      %v918 = vsel %vm386, %v872, 0
      %v921 = vsel %vm390, %v873, 0
      %v924 = vsel %vm390, %v874, 0
      %926 = vmatpush.bf16.msra.mxu0 0
      %927 = vmatpush.bf16.msra.mxu0 0
      %928 = vmatpush.bf16.msra.mxu0 0
      %929 = vmatpush.bf16.msra.mxu0 0
      %930 = vmatpush.bf16.msra.mxu0 0
      %931 = vmatpush.bf16.msra.mxu0 0
      %932 = vmatpush.bf16.msra.mxu0 0
      %933 = vmatpush.bf16.msra.mxu0 %v921
      %934 = vmatmul.bf16.gmra.mxu0 %v918
      %v935 = vpop.f32.mrf.mxu0
      %v936 = vadd.f32 %v902, %v935
      %v937 = vpop.f32.mrf.mxu0
      %938 = vdwg.mxu0
      %939 = vmatpush.bf16.msra.mxu0 0
      %940 = vmatpush.bf16.msra.mxu0 0
      %941 = vmatpush.bf16.msra.mxu0 0
      %942 = vmatpush.bf16.msra.mxu0 0
      %943 = vmatpush.bf16.msra.mxu0 0
      %944 = vmatpush.bf16.msra.mxu0 0
      %945 = vmatpush.bf16.msra.mxu0 0
      %946 = vmatpush.bf16.msra.mxu0 %v924
      %947 = vmatmul.bf16.gmra.mxu0 %v918
      %v948 = vpop.f32.mrf.mxu0
      %v949 = vadd.f32 %v915, %v948
      %v950 = vpop.f32.mrf.mxu0
      %951 = vdwg.mxu0
      %v952 = vld [vmem:[%s3] sm:$0x3]
      %v953 = vpack.c.bf16 %v822, %v822
      %v954 = vpack.c.bf16 %v823, %v823
      %956 = vst [vmem:[#allocation1] ss:$4 sm:$0xff] %v952
      %v957 = vld.sshfl [vmem:[#allocation1] sm:$0xff pattern:$0x73625140]
      %959 = vrot.lane.b32.xlu0 %v957, 120
      %v960 = vpop.permute.xlu0 %959
      %v962 = vsel %vm386, %v960, 0
      %v965 = vsel %vm390, %v953, 0
      %v968 = vsel %vm390, %v954, 0
      %970 = vmatpush.bf16.msra.mxu0 0
      %971 = vmatpush.bf16.msra.mxu0 0
      %972 = vmatpush.bf16.msra.mxu0 0
      %973 = vmatpush.bf16.msra.mxu0 0
      %974 = vmatpush.bf16.msra.mxu0 0
      %975 = vmatpush.bf16.msra.mxu0 0
      %976 = vmatpush.bf16.msra.mxu0 0
      %977 = vmatpush.bf16.msra.mxu0 %v965
      %978 = vmatmul.bf16.gmra.mxu0 %v962
      %v979 = vpop.f32.mrf.mxu0
      %v980 = vadd.f32 0.0, %v979
      %v981 = vpop.f32.mrf.mxu0
      %982 = vdwg.mxu0
      %983 = vmatpush.bf16.msra.mxu0 0
      %984 = vmatpush.bf16.msra.mxu0 0
      %985 = vmatpush.bf16.msra.mxu0 0
      %986 = vmatpush.bf16.msra.mxu0 0
      %987 = vmatpush.bf16.msra.mxu0 0
      %988 = vmatpush.bf16.msra.mxu0 0
      %989 = vmatpush.bf16.msra.mxu0 0
      %990 = vmatpush.bf16.msra.mxu0 %v968
      %991 = vmatmul.bf16.gmra.mxu0 %v962
      %v992 = vpop.f32.mrf.mxu0
      %v993 = vadd.f32 0.0, %v992
      %v994 = vpop.f32.mrf.mxu0
      %995 = vdwg.mxu0
      %v996 = vadd.f32 %v936, %v980
      %v997 = vadd.f32 %v949, %v993
      %v998 = vld [vmem:[%s3] sm:$0x3]
      %v999 = vpack.c.bf16 %v832, %v832
      %v1000 = vpack.c.bf16 %v833, %v833
      %1002 = vst [vmem:[#allocation1] ss:$4 sm:$0xff] %v998
      %v1003 = vld.sshfl [vmem:[#allocation1] sm:$0xff pattern:$0x73625140]
      %1005 = vrot.lane.b32.xlu0 %v1003, 116
      %v1006 = vpop.permute.xlu0 %1005
      %v1008 = vsel %vm386, %v1006, 0
      %v1011 = vsel %vm390, %v999, 0
      %v1014 = vsel %vm390, %v1000, 0
      %1016 = vmatpush.bf16.msra.mxu0 0
      %1017 = vmatpush.bf16.msra.mxu0 0
      %1018 = vmatpush.bf16.msra.mxu0 0
      %1019 = vmatpush.bf16.msra.mxu0 0
      %1020 = vmatpush.bf16.msra.mxu0 0
      %1021 = vmatpush.bf16.msra.mxu0 0
      %1022 = vmatpush.bf16.msra.mxu0 0
      %1023 = vmatpush.bf16.msra.mxu0 %v1011
      %1024 = vmatmul.bf16.gmra.mxu0 %v1008
      %v1025 = vpop.f32.mrf.mxu0
      %v1026 = vadd.f32 0.0, %v1025
      %v1027 = vpop.f32.mrf.mxu0
      %1028 = vdwg.mxu0
      %1029 = vmatpush.bf16.msra.mxu0 0
      %1030 = vmatpush.bf16.msra.mxu0 0
      %1031 = vmatpush.bf16.msra.mxu0 0
      %1032 = vmatpush.bf16.msra.mxu0 0
      %1033 = vmatpush.bf16.msra.mxu0 0
      %1034 = vmatpush.bf16.msra.mxu0 0
      %1035 = vmatpush.bf16.msra.mxu0 0
      %1036 = vmatpush.bf16.msra.mxu0 %v1014
      %1037 = vmatmul.bf16.gmra.mxu0 %v1008
      %v1038 = vpop.f32.mrf.mxu0
      %v1039 = vadd.f32 0.0, %v1038
      %v1040 = vpop.f32.mrf.mxu0
      %1041 = vdwg.mxu0
      %v1042 = vadd.f32 %v996, %v1026
      %v1043 = vadd.f32 %v997, %v1039
      %v1044 = vld [vmem:[%s3] sm:$0x3]
      %v1045 = vpack.c.bf16 %v792, %v792
      %v1046 = vpack.c.bf16 %v793, %v793
      %1048 = vst [vmem:[#allocation1] ss:$4 sm:$0xff] %v1044
      %v1049 = vld.sshfl [vmem:[#allocation1] sm:$0xff pattern:$0x73625140]
      %1051 = vrot.lane.b32.xlu0 %v1049, 112
      %v1052 = vpop.permute.xlu0 %1051
      %v1054 = vsel %vm386, %v1052, 0
      %v1057 = vsel %vm390, %v1045, 0
      %v1060 = vsel %vm390, %v1046, 0
      %1062 = vmatpush.bf16.msra.mxu0 0
      %1063 = vmatpush.bf16.msra.mxu0 0
      %1064 = vmatpush.bf16.msra.mxu0 0
      %1065 = vmatpush.bf16.msra.mxu0 0
      %1066 = vmatpush.bf16.msra.mxu0 0
      %1067 = vmatpush.bf16.msra.mxu0 0
      %1068 = vmatpush.bf16.msra.mxu0 0
      %1069 = vmatpush.bf16.msra.mxu0 %v1057
      %1070 = vmatmul.bf16.gmra.mxu0 %v1054
      %v1071 = vpop.f32.mrf.mxu0
      %v1072 = vadd.f32 0.0, %v1071
      %v1073 = vpop.f32.mrf.mxu0
      %1074 = vdwg.mxu0
      %1075 = vmatpush.bf16.msra.mxu0 0
      %1076 = vmatpush.bf16.msra.mxu0 0
      %1077 = vmatpush.bf16.msra.mxu0 0
      %1078 = vmatpush.bf16.msra.mxu0 0
      %1079 = vmatpush.bf16.msra.mxu0 0
      %1080 = vmatpush.bf16.msra.mxu0 0
      %1081 = vmatpush.bf16.msra.mxu0 0
      %1082 = vmatpush.bf16.msra.mxu0 %v1060
      %1083 = vmatmul.bf16.gmra.mxu0 %v1054
      %v1084 = vpop.f32.mrf.mxu0
      %v1085 = vadd.f32 0.0, %v1084
      %v1086 = vpop.f32.mrf.mxu0
      %1087 = vdwg.mxu0
      %v1088 = vadd.f32 %v1042, %v1072
      %v1089 = vadd.f32 %v1043, %v1085
      %v1090 = vld [vmem:[%s3] sm:$0x3]
      %v1091 = vpack.c.bf16 %v842, %v842
      %v1092 = vpack.c.bf16 %v843, %v843
      %1094 = vst [vmem:[#allocation1] ss:$4 sm:$0xff] %v1090
      %v1095 = vld.sshfl [vmem:[#allocation1] sm:$0xff pattern:$0x73625140]
      %1097 = vrot.lane.b32.xlu0 %v1095, 108
      %v1098 = vpop.permute.xlu0 %1097
      %v1100 = vsel %vm386, %v1098, 0
      %v1103 = vsel %vm390, %v1091, 0
      %v1106 = vsel %vm390, %v1092, 0
      %1108 = vmatpush.bf16.msra.mxu0 0
      %1109 = vmatpush.bf16.msra.mxu0 0
      %1110 = vmatpush.bf16.msra.mxu0 0
      %1111 = vmatpush.bf16.msra.mxu0 0
      %1112 = vmatpush.bf16.msra.mxu0 0
      %1113 = vmatpush.bf16.msra.mxu0 0
      %1114 = vmatpush.bf16.msra.mxu0 0
      %1115 = vmatpush.bf16.msra.mxu0 %v1103
      %1116 = vmatmul.bf16.gmra.mxu0 %v1100
      %v1117 = vpop.f32.mrf.mxu0
      %v1118 = vadd.f32 0.0, %v1117
      %v1119 = vpop.f32.mrf.mxu0
      %1120 = vdwg.mxu0
      %1121 = vmatpush.bf16.msra.mxu0 0
      %1122 = vmatpush.bf16.msra.mxu0 0
      %1123 = vmatpush.bf16.msra.mxu0 0
      %1124 = vmatpush.bf16.msra.mxu0 0
      %1125 = vmatpush.bf16.msra.mxu0 0
      %1126 = vmatpush.bf16.msra.mxu0 0
      %1127 = vmatpush.bf16.msra.mxu0 0
      %1128 = vmatpush.bf16.msra.mxu0 %v1106
      %1129 = vmatmul.bf16.gmra.mxu0 %v1100
      %v1130 = vpop.f32.mrf.mxu0
      %v1131 = vadd.f32 0.0, %v1130
      %v1132 = vpop.f32.mrf.mxu0
      %1133 = vdwg.mxu0
      %v1134 = vadd.f32 %v1088, %v1118
      %v1135 = vadd.f32 %v1089, %v1131
      %v1136 = vld [vmem:[%s3] sm:$0x3]
      %v1137 = vpack.c.bf16 %v852, %v852
      %v1138 = vpack.c.bf16 %v853, %v853
      %1140 = vst [vmem:[#allocation1] ss:$4 sm:$0xff] %v1136
      %v1141 = vld.sshfl [vmem:[#allocation1] sm:$0xff pattern:$0x73625140]
      %1143 = vrot.lane.b32.xlu0 %v1141, 104
      %v1144 = vpop.permute.xlu0 %1143
      %v1146 = vsel %vm386, %v1144, 0
      %v1149 = vsel %vm390, %v1137, 0
      %v1152 = vsel %vm390, %v1138, 0
      %1154 = vmatpush.bf16.msra.mxu0 0
      %1155 = vmatpush.bf16.msra.mxu0 0
      %1156 = vmatpush.bf16.msra.mxu0 0
      %1157 = vmatpush.bf16.msra.mxu0 0
      %1158 = vmatpush.bf16.msra.mxu0 0
      %1159 = vmatpush.bf16.msra.mxu0 0
      %1160 = vmatpush.bf16.msra.mxu0 0
      %1161 = vmatpush.bf16.msra.mxu0 %v1149
      %1162 = vmatmul.bf16.gmra.mxu0 %v1146
      %v1163 = vpop.f32.mrf.mxu0
      %v1164 = vadd.f32 0.0, %v1163
      %v1165 = vpop.f32.mrf.mxu0
      %1166 = vdwg.mxu0
      %1167 = vmatpush.bf16.msra.mxu0 0
      %1168 = vmatpush.bf16.msra.mxu0 0
      %1169 = vmatpush.bf16.msra.mxu0 0
      %1170 = vmatpush.bf16.msra.mxu0 0
      %1171 = vmatpush.bf16.msra.mxu0 0
      %1172 = vmatpush.bf16.msra.mxu0 0
      %1173 = vmatpush.bf16.msra.mxu0 0
      %1174 = vmatpush.bf16.msra.mxu0 %v1152
      %1175 = vmatmul.bf16.gmra.mxu0 %v1146
      %v1176 = vpop.f32.mrf.mxu0
      %v1177 = vadd.f32 0.0, %v1176
      %v1178 = vpop.f32.mrf.mxu0
      %1179 = vdwg.mxu0
      %v1180 = vadd.f32 %v1134, %v1164
      %v1181 = vadd.f32 %v1135, %v1177
      %v1182 = vld [vmem:[%s3] sm:$0x3]
      %v1183 = vpack.c.bf16 %v858, %v858
      %v1184 = vpack.c.bf16 %v861, %v861
      %1186 = vst [vmem:[#allocation1] ss:$4 sm:$0xff] %v1182
      %v1187 = vld.sshfl [vmem:[#allocation1] sm:$0xff pattern:$0x73625140]
      %1189 = vrot.lane.b32.xlu0 %v1187, 100
      %v1190 = vpop.permute.xlu0 %1189
      %v1192 = vsel %vm386, %v1190, 0
      %v1195 = vsel %vm390, %v1183, 0
      %v1198 = vsel %vm390, %v1184, 0
      %1200 = vmatpush.bf16.msra.mxu0 0
      %1201 = vmatpush.bf16.msra.mxu0 0
      %1202 = vmatpush.bf16.msra.mxu0 0
      %1203 = vmatpush.bf16.msra.mxu0 0
      %1204 = vmatpush.bf16.msra.mxu0 0
      %1205 = vmatpush.bf16.msra.mxu0 0
      %1206 = vmatpush.bf16.msra.mxu0 0
      %1207 = vmatpush.bf16.msra.mxu0 %v1195
      %1208 = vmatmul.bf16.gmra.mxu0 %v1192
      %v1209 = vpop.f32.mrf.mxu0
      %v1210 = vadd.f32 0.0, %v1209
      %v1211 = vpop.f32.mrf.mxu0
      %1212 = vdwg.mxu0
      %1213 = vmatpush.bf16.msra.mxu0 0
      %1214 = vmatpush.bf16.msra.mxu0 0
      %1215 = vmatpush.bf16.msra.mxu0 0
      %1216 = vmatpush.bf16.msra.mxu0 0
      %1217 = vmatpush.bf16.msra.mxu0 0
      %1218 = vmatpush.bf16.msra.mxu0 0
      %1219 = vmatpush.bf16.msra.mxu0 0
      %1220 = vmatpush.bf16.msra.mxu0 %v1198
      %1221 = vmatmul.bf16.gmra.mxu0 %v1192
      %v1222 = vpop.f32.mrf.mxu0
      %v1223 = vadd.f32 0.0, %v1222
      %v1224 = vpop.f32.mrf.mxu0
      %1225 = vdwg.mxu0
      %v1226 = vadd.f32 %v1180, %v1210
      %v1227 = vadd.f32 %v1181, %v1223
      %v1228 = vld [vmem:[%s3] sm:$0x3]
      %v1229 = vpack.c.bf16 %v870, %v870
      %v1230 = vpack.c.bf16 %v871, %v871
      %1232 = vst [vmem:[#allocation1] ss:$4 sm:$0xff] %v1228
      %v1233 = vld.sshfl [vmem:[#allocation1] sm:$0xff pattern:$0x73625140]
      %1235 = vrot.lane.b32.xlu0 %v1233, 96
      %v1236 = vpop.permute.xlu0 %1235
      %v1238 = vsel %vm386, %v1236, 0
      %v1241 = vsel %vm390, %v1229, 0
      %v1244 = vsel %vm390, %v1230, 0
      %1246 = vmatpush.bf16.msra.mxu0 0
      %1247 = vmatpush.bf16.msra.mxu0 0
      %1248 = vmatpush.bf16.msra.mxu0 0
      %1249 = vmatpush.bf16.msra.mxu0 0
      %1250 = vmatpush.bf16.msra.mxu0 0
      %1251 = vmatpush.bf16.msra.mxu0 0
      %1252 = vmatpush.bf16.msra.mxu0 0
      %1253 = vmatpush.bf16.msra.mxu0 %v1241
      %1254 = vmatmul.bf16.gmra.mxu0 %v1238
      %v1255 = vpop.f32.mrf.mxu0
      %v1256 = vadd.f32 0.0, %v1255
      %v1257 = vpop.f32.mrf.mxu0
      %1258 = vdwg.mxu0
      %1259 = vmatpush.bf16.msra.mxu0 0
      %1260 = vmatpush.bf16.msra.mxu0 0
      %1261 = vmatpush.bf16.msra.mxu0 0
      %1262 = vmatpush.bf16.msra.mxu0 0
      %1263 = vmatpush.bf16.msra.mxu0 0
      %1264 = vmatpush.bf16.msra.mxu0 0
      %1265 = vmatpush.bf16.msra.mxu0 0
      %1266 = vmatpush.bf16.msra.mxu0 %v1244
      %1267 = vmatmul.bf16.gmra.mxu0 %v1238
      %v1268 = vpop.f32.mrf.mxu0
      %v1269 = vadd.f32 0.0, %v1268
      %v1270 = vpop.f32.mrf.mxu0
      %1271 = vdwg.mxu0
      %v1272 = vadd.f32 %v1226, %v1256
      %v1273 = vadd.f32 %v1227, %v1269
      %v1274 = vld [vmem:[%s4] sm:$0xf]
      %1276 = vset.pattern.permute.xlu0 0
      %1277 = vperm.xlu0 %1276, %v1274
      %v1278 = vpop.permute.xlu0 %1277
      %v1280 = vadd.f32 %v1272, %v1278
      %v1281 = vadd.f32 %v1273, %v1278
      %1282 = vst [vmem:[#allocation1] ss:$2 sm:$0xff] %v257
      %v1283 = vld.sshfl [vmem:[#allocation1] sm:$0xff pattern:$0x75316420]
      %v1284 = vld.sshfl [vmem:[#allocation1 + $0x8] sm:$0xff pattern:$0x75316420]
      %v1287 = vadd.f32 %v1280, %v1283
      %v1288 = vadd.f32 %v1281, %v1284
      %v1289 = vmax.f32 %v1287, 0.0
      %v1290 = vmax.f32 %v1288, 0.0
      %v1293 = vrot.slane %v1290, 4
      %vm1294 = vcmask 1043456
      %v1295 = vsel %vm1294, %v1289, %v1293
      %1297 = vst [vmem:[%s224] sm:$0xff] %v1295
      %p1298 = scmp.lt.s32.totalorder %s16, 1
      %s1299 = scalar_select %p1298, %s16, 1
      %s1300 = smul.addr %s1299, 2
      %s1301 = smul.addr %s1300, 4
      %s1302 = scalar_lea.vmem %s5, %s1301
      // Predicated region
      $region41: #{basic_block_forward.1} parent=39 // pred_check
        %p1303 = pneg %p144
      $region42: #{basic_block_forward.1} parent=39 // pred_check_branch
        %1305 = sbr.rel (%p1303) target = $region44
      $region43: #{basic_block_forward.1} parent=39 // pred_region
        _
      $region44: #{basic_block_forward.1} parent=39 // pred_fallthru
        _
    $region40: #{basic_block_forward.1} parent=5 // pred_fallthru
      _
    %p1306 = scmp.le.s32.totalorder 2, %s11
    // Predicated region
    $region45: #{basic_block_forward.1} parent=5 // pred_check
      %p1307 = pneg %p1306
    $region46: #{basic_block_forward.1} parent=5 // pred_check_branch
      %1309 = sbr.rel (%p1307) target = $region48
    $region47: #{basic_block_forward.1} parent=5 // pred_region
      %s1310 = ssub.s32 %s11, 2
      // Predicated region
      $region49: #{basic_block_forward.1} parent=47 // pred_check
        %p1311 = pneg %p150
      $region50: #{basic_block_forward.1} parent=47 // pred_check_branch
        %1313 = sbr.rel (%p1311) target = $region52
      $region51: #{basic_block_forward.1} parent=47 // pred_region
        %p1314 = scmp.lt.s32.totalorder %s17, 1
        %s1315 = scalar_select %p1314, %s17, 1
        %s1316 = smul.addr %s1315, 2
        %s1317 = smul.addr %s1316, 4
        %s1318 = scalar_lea.vmem %s5, %s1317
      $region52: #{basic_block_forward.1} parent=47 // pred_fallthru
        _
    $region48: #{basic_block_forward.1} parent=5 // pred_fallthru
      _
  $region6: #{basic_block_forward.1} parent=0 // loop_footer
    %s15 = sadd.s32 1, %s11
  $region7: #{basic_block_forward.1} parent=0 // loop_footer_branch
    %10 = sbr.rel target = $region3
  $region8: #{basic_block_forward.1} parent=0 // loop_exit
    _

</llo_original>
